<compile_context>
chip_gen: v7x
topology: tpu7x:2x2x1
jax: 0.10.0
libtpu: 0.0.40
codegen_flags: <defaults>
</compile_context>

<pallas_src>
import jax
import jax.numpy as jnp
from jax import lax
from jax.experimental import pallas as pl
from jax.experimental.pallas import tpu as pltpu

BN_EPS = 1e-5


def _ceil_to(x, m):
    return ((x + m - 1) // m) * m


def _row_block(h2):
    """Rows of conv2/conv3 output processed per iteration (must divide H2)."""
    for rb in (8, 7, 4, 2):
        if h2 % rb == 0:
            return rb
    return 1


def _loop(n, body):
    """Fully unroll short static loops (LLO visibility); fori_loop fallback."""
    if n <= 16:
        for i in range(n):
            body(i)
    else:
        lax.fori_loop(0, n, lambda i, c: (body(i), c)[1], 0)


# --------------------------------------------------------------------------- #
# Kernel
# --------------------------------------------------------------------------- #
def convstem_kernel(xc_ref,            # [1, H2, W2, 64*Cinp] bf16  block-im2col slab
                    k1_ref, b1_ref,    # [64*Cinp, 4*C1] bf16 ; [1, 4*C1] f32
                    k2_ref, b2_ref,    # [2, 2, 4*C1, C2p] bf16 ; [1, C2p] f32
                    k3_ref, b3_ref,    # [C2p, C3] bf16 ; [1, C3] f32
                    out_ref,           # [1, H2, W2, C3] (bf16 by default)
                    o1p_ref):          # scratch [H2+1, W2+1, 4*C1] bf16
    _, H2, W2, K1dim = xc_ref.shape
    N1 = k1_ref.shape[-1]              # 4*C1 (phase-packed conv1 channels)
    C3 = out_ref.shape[-1]
    RB = _row_block(H2)
    nblk = H2 // RB

    # Zero only the top/left halo of the conv1 scratch; conv1 stores never
    # touch row 0 / column 0.  Re-zeroed every grid step (a few KB of vst) so
    # it stays correct when the batch axis is sharded across TensorCores.
    o1p_ref[0] = jnp.zeros((W2 + 1, N1), o1p_ref.dtype)
    o1p_ref[:, 0:1, :] = jnp.zeros((H2 + 1, 1, N1), o1p_ref.dtype)

    # ---- conv1: 3x3 / s2 / p1 (+ folded BN) + ReLU ------------------------ #
    # One K=64*Cinp matmul per RB-row block over the block-im2col slab.
    def conv1_block(i):
        r0 = i * RB
        if not isinstance(i, int):
            r0 = pl.multiple_of(r0, RB)
        lhs = xc_ref[0, pl.ds(r0, RB)].reshape(RB * W2, K1dim)
        acc = jnp.dot(lhs, k1_ref[...], preferred_element_type=jnp.float32)
        act = jnp.maximum(acc + b1_ref[...], 0.0)
        o1p_ref[pl.ds(r0 + 1, RB), 1:, :] = (
            act.reshape(RB, W2, N1).astype(o1p_ref.dtype))

    _loop(nblk, conv1_block)

    # ---- conv2 (3x3 / s2 / p1, folded BN, ReLU) + conv3 (1x1 + bias) ------ #
    # Row-blocked: 4 phase-packed tap matmuls (M = RB*W2) + one projection.
    def conv23_block(i):
        r0 = i * RB
        if not isinstance(i, int):
            r0 = pl.multiple_of(r0, RB)
        acc = jnp.dot(o1p_ref[pl.ds(r0, RB), 0:W2, :].reshape(RB * W2, N1),
                      k2_ref[0, 0], preferred_element_type=jnp.float32)
        acc += jnp.dot(o1p_ref[pl.ds(r0, RB), 1:W2 + 1, :].reshape(RB * W2, N1),
                       k2_ref[0, 1], preferred_element_type=jnp.float32)
        acc += jnp.dot(o1p_ref[pl.ds(r0 + 1, RB), 0:W2, :].reshape(RB * W2, N1),
                       k2_ref[1, 0], preferred_element_type=jnp.float32)
        acc += jnp.dot(o1p_ref[pl.ds(r0 + 1, RB), 1:W2 + 1, :].reshape(RB * W2, N1),
                       k2_ref[1, 1], preferred_element_type=jnp.float32)
        hid = jnp.maximum(acc + b2_ref[...], 0.0).astype(k3_ref.dtype)
        out = (jnp.dot(hid, k3_ref[...], preferred_element_type=jnp.float32)
               + b3_ref[...])
        out_ref[0, pl.ds(r0, RB)] = (
            out.reshape(RB, W2, C3).astype(out_ref.dtype))

    _loop(nblk, conv23_block)


# --------------------------------------------------------------------------- #
# Parameter folding / packing (trace-time layout plumbing, no kernel FLOPs)
# --------------------------------------------------------------------------- #
def _fold_params(p):
    """Fold eval-mode BN into the conv weights and re-pack:
       conv1 -> single [64*Cinp, 4*C1] matmul over the block-im2col slab,
       conv2 -> 2x2 block-tap matmuls with C2 zero-padded to lane-dense C2p,
       conv3 -> [C2p, C3] matmul (zero rows for the C2 padding)."""
    w1 = p["w1"]; g1, be1, m1, v1 = p["bn1"]
    w2 = p["w2"]; g2, be2, m2, v2 = p["bn2"]
    w3 = p["w3"]; b3 = p["b3"]
    C1, Cin = w1.shape[0], w1.shape[1]
    C2, C3 = w2.shape[0], w3.shape[0]
    Cinp = _ceil_to(Cin, 4)            # e.g. 3 -> 4, so K = 64*Cinp = 256
    C2p = _ceil_to(C2, 128)            # lane-dense conv2-out / conv3-contraction

    s1 = g1 / jnp.sqrt(v1 + BN_EPS); t1 = be1 - m1 * s1
    s2 = g2 / jnp.sqrt(v2 + BN_EPS); t2 = be2 - m2 * s2

    # conv1: o1[2i+a, 2j+b, co] = sum_{ky,kx,c} w1[co,c,ky,kx] *
    #        x[4(i+di)+py, 4(j+dj)+px, c]  with (di,py)/(dj,px) derived from
    #        t = 2a+ky-1 / u = 2b+kx-1.  Slab channel index:
    #        tap*(16*Cinp) + (py*4+px)*Cinp + c, tap = (di+1)*2 + (dj+1).
    K1 = jnp.zeros((64 * Cinp, 4 * C1), jnp.float32)
    for a in range(2):
        for ky in range(3):
            t = 2 * a + ky - 1
            di, py = (0, t) if t >= 0 else (-1, 3)
            for b in range(2):
                for kx in range(3):
                    u = 2 * b + kx - 1
                    dj, px = (0, u) if u >= 0 else (-1, 3)
                    tap = (di + 1) * 2 + (dj + 1)
                    r0 = tap * 16 * Cinp + (py * 4 + px) * Cinp
                    c0 = (a * 2 + b) * C1
                    K1 = K1.at[r0:r0 + Cin, c0:c0 + C1].set(w1[:, :, ky, kx].T)
    K1 = K1 * jnp.tile(s1, 4)[None, :]          # fold BN1 scale
    b1 = jnp.tile(t1, 4)[None, :]                # folded BN1 shift

    # conv2: output row i2 uses conv1 rows 2*i2 + (ky-1); ky -> (dy, phase a).
    K2 = jnp.zeros((2, 2, 4 * C1, C2p), jnp.float32)
    for ky in range(3):
        dy, a = (0, 1) if ky == 0 else (1, ky - 1)
        for kx in range(3):
            dx, b = (0, 1) if kx == 0 else (1, kx - 1)
            r0 = (a * 2 + b) * C1
            K2 = K2.at[dy, dx, r0:r0 + C1, 0:C2].set(w2[:, :, ky, kx].T)
    K2 = K2 * jnp.pad(s2, (0, C2p - C2))[None, None, None, :]   # fold BN2 scale
    b2 = jnp.pad(t2, (0, C2p - C2))[None, :]

    K3 = jnp.zeros((C2p, C3), jnp.float32).at[0:C2, :].set(w3[:, :, 0, 0].T)
    b3 = b3[None, :]

    return (K1.astype(jnp.bfloat16), b1.astype(jnp.float32),
            K2.astype(jnp.bfloat16), b2.astype(jnp.float32),
            K3.astype(jnp.bfloat16), b3.astype(jnp.float32))


# --------------------------------------------------------------------------- #
# Wrapper
# --------------------------------------------------------------------------- #
def convstem_forward(x, params, out_dtype=jnp.bfloat16):
    """x: [B, 3, H, W] float32 (NCHW like the PyTorch module).
    Returns [B, (H//4)*(W//4), embed_dim] in `out_dtype` (bf16 by default to
    halve HBM writeback / VMEM; pass jnp.float32 for f32 output)."""
    B, Cin, H, W = x.shape
    assert H % 4 == 0 and W % 4 == 0
    H2, W2 = H // 4, W // 4
    Cinp = _ceil_to(Cin, 4)

    K1, b1, K2, b2, K3, b3 = _fold_params(params)
    Kdim = K1.shape[0]        # 64*Cinp
    N1 = K1.shape[-1]         # 4*C1
    C2p = K2.shape[-1]
    C3 = K3.shape[-1]

    # Layout plumbing (trace time): NCHW -> NHWC, pad channels to Cinp,
    # space-to-depth mod 4, pad one zero block on top/left, then concatenate
    # the four stride-2 tap blocks along the channel axis (block-im2col) so
    # conv1 becomes a single lane-dense K = 64*Cinp matmul in the kernel.
    xh = jnp.transpose(x, (0, 2, 3, 1))
    if Cinp > Cin:
        xh = jnp.pad(xh, ((0, 0), (0, 0), (0, 0), (0, Cinp - Cin)))
    xs = (xh.reshape(B, H2, 4, W2, 4, Cinp)
            .transpose(0, 1, 3, 2, 4, 5)
            .reshape(B, H2, W2, 16 * Cinp))
    xsp = jnp.pad(xs, ((0, 0), (1, 0), (1, 0), (0, 0)))
    xc = jnp.concatenate([
        xsp[:, 0:H2,     0:W2,     :],    # input block (i-1, j-1)
        xsp[:, 0:H2,     1:W2 + 1, :],    # (i-1, j  )
        xsp[:, 1:H2 + 1, 0:W2,     :],    # (i,   j-1)
        xsp[:, 1:H2 + 1, 1:W2 + 1, :],    # (i,   j  )
    ], axis=-1).astype(jnp.bfloat16)      # [B, H2, W2, 64*Cinp]

    out = pl.pallas_call(
        convstem_kernel,
        out_shape=jax.ShapeDtypeStruct((B, H2, W2, C3), out_dtype),
        grid=(B,),
        in_specs=[
            pl.BlockSpec((1, H2, W2, Kdim), lambda i: (i, 0, 0, 0)),
            # Weights / biases: constant index_maps keep them VMEM-resident.
            pl.BlockSpec((Kdim, N1), lambda i: (0, 0)),
            pl.BlockSpec((1, N1), lambda i: (0, 0)),
            pl.BlockSpec((2, 2, N1, C2p), lambda i: (0, 0, 0, 0)),
            pl.BlockSpec((1, C2p), lambda i: (0, 0)),
            pl.BlockSpec((C2p, C3), lambda i: (0, 0)),
            pl.BlockSpec((1, C3), lambda i: (0, 0)),
        ],
        out_specs=pl.BlockSpec((1, H2, W2, C3), lambda i: (i, 0, 0, 0)),
        scratch_shapes=[pltpu.VMEM((H2 + 1, W2 + 1, N1), jnp.bfloat16)],
        compiler_params=pltpu.CompilerParams(
            dimension_semantics=("parallel",),
            vmem_limit_bytes=32 * 1024 * 1024),
    )(xc, K1, b1, K2, b2, K3, b3)

    # Equivalent of proj(x).flatten(2).transpose(1, 2) (output already NHWC).
    return out.reshape(B, H2 * W2, C3)


# --------------------------------------------------------------------------- #
# Parameters + pure-JAX f32 reference (mirrors the PyTorch module, eval mode)
# --------------------------------------------------------------------------- #
def init_convstem_params(key, embed_dim=32, in_chans=3):
    C1, C2, C3 = embed_dim // 8, embed_dim // 4, embed_dim
    ks = jax.random.split(key, 6)

    def conv_w(k, co, ci, kh, kw):
        fan_in = ci * kh * kw
        return ((2.0 / fan_in) ** 0.5
                * jax.random.normal(k, (co, ci, kh, kw), jnp.float32))

    def bn_params(k, c):
        ka, kb, kc, kd = jax.random.split(k, 4)
        gamma = 1.0 + 0.2 * jax.random.normal(ka, (c,), jnp.float32)
        beta = 0.1 * jax.random.normal(kb, (c,), jnp.float32)
        mean = 0.1 * jax.random.normal(kc, (c,), jnp.float32)
        var = 0.5 + jax.random.uniform(kd, (c,), jnp.float32)
        return (gamma, beta, mean, var)

    return dict(
        w1=conv_w(ks[0], C1, in_chans, 3, 3), bn1=bn_params(ks[1], C1),
        w2=conv_w(ks[2], C2, C1, 3, 3),       bn2=bn_params(ks[3], C2),
        w3=conv_w(ks[4], C3, C2, 1, 1),
        b3=0.1 * jax.random.normal(ks[5], (C3,), jnp.float32),
    )


def convstem_reference(x, p):
    def conv(x, w, stride, pad):
        return lax.conv_general_dilated(
            x, w, (stride, stride), [(pad, pad), (pad, pad)],
            dimension_numbers=("NCHW", "OIHW", "NCHW"))

    def bn(x, stats):
        g, b, m, v = stats
        s = g / jnp.sqrt(v + BN_EPS)
        return x * s[None, :, None, None] + (b - m * s)[None, :, None, None]

    h = jax.nn.relu(bn(conv(x, p["w1"], 2, 1), p["bn1"]))
    h = jax.nn.relu(bn(conv(h, p["w2"], 2, 1), p["bn2"]))
    h = conv(h, p["w3"], 1, 0) + p["b3"][None, :, None, None]
    B, C3, H2, W2 = h.shape
    return h.reshape(B, C3, H2 * W2).transpose(0, 2, 1)  # flatten(2).T


if __name__ == "__main__":
    key = jax.random.PRNGKey(0)
    k_param, k_x = jax.random.split(key)

    # Small but valid shapes: 16x16 image, patch 4 -> 4x4 = 16 patches, D=32.
    B, in_chans, img_size, embed_dim = 2, 3, 16, 32
    params = init_convstem_params(k_param, embed_dim=embed_dim, in_chans=in_chans)
    x = jax.random.normal(k_x, (B, in_chans, img_size, img_size), jnp.float32)

    fwd = jax.jit(convstem_forward)
    out = jax.block_until_ready(fwd(x, params))
    ref = convstem_reference(x, params)
    assert out.shape == (B, (img_size // 4) ** 2, embed_dim), out.shape
    assert out.dtype == jnp.bfloat16
    # bf16 matmul operands + bf16 output with f32 accumulation.
    assert jnp.allclose(out.astype(jnp.float32), ref, atol=1e-1, rtol=5e-2), \
        float(jnp.max(jnp.abs(out.astype(jnp.float32) - ref)))

    # Second check at a slightly larger, lane-dense shape (4*C1 = 128, RB = 8).
    B2, img2, D2 = 1, 32, 256
    params2 = init_convstem_params(jax.random.PRNGKey(1), embed_dim=D2, in_chans=3)
    x2 = jax.random.normal(jax.random.PRNGKey(2), (B2, 3, img2, img2), jnp.float32)
    out2 = jax.block_until_ready(jax.jit(convstem_forward)(x2, params2))
    ref2 = convstem_reference(x2, params2)
    assert out2.shape == (B2, (img2 // 4) ** 2, D2), out2.shape
    assert jnp.allclose(out2.astype(jnp.float32), ref2, atol=1e-1, rtol=5e-2), \
        float(jnp.max(jnp.abs(out2.astype(jnp.float32) - ref2)))

    print("KERNEL_OK")
</pallas_src>

<mosaic_0001>
module attributes {stable_mosaic.version = 11 : i64} {
  func.func @convstem_kernel(%arg0: i32, %arg1: memref<1x4x4x256xbf16, #tpu.memory_space<vmem>>, %arg2: memref<256x16xbf16, #tpu.memory_space<vmem>>, %arg3: memref<1x16xf32, #tpu.memory_space<vmem>>, %arg4: memref<2x2x16x128xbf16, #tpu.memory_space<vmem>>, %arg5: memref<1x128xf32, #tpu.memory_space<vmem>>, %arg6: memref<128x32xbf16, #tpu.memory_space<vmem>>, %arg7: memref<1x32xf32, #tpu.memory_space<vmem>>, %arg8: memref<1x4x4x32xbf16, #tpu.memory_space<vmem>>, %arg9: memref<5x5x16xbf16, #tpu.memory_space<vmem>>) attributes {dimension_semantics = [#tpu.dimension_semantics<parallel>], iteration_bounds = array<i64: 2>, scalar_prefetch = 0 : i64, scratch_operands = 1 : i64, tpu.core_type = #tpu.core_type<tc>, window_params = [{transform_indices = @transform_0, window_bounds = array<i64: 1, 4, 4, 256>}, {pipeline_mode = #tpu.pipeline_mode<synchronous>, transform_indices = @transform_1, window_bounds = array<i64: 256, 16>}, {pipeline_mode = #tpu.pipeline_mode<synchronous>, transform_indices = @transform_2, window_bounds = array<i64: 1, 16>}, {pipeline_mode = #tpu.pipeline_mode<synchronous>, transform_indices = @transform_3, window_bounds = array<i64: 2, 2, 16, 128>}, {pipeline_mode = #tpu.pipeline_mode<synchronous>, transform_indices = @transform_4, window_bounds = array<i64: 1, 128>}, {pipeline_mode = #tpu.pipeline_mode<synchronous>, transform_indices = @transform_5, window_bounds = array<i64: 128, 32>}, {pipeline_mode = #tpu.pipeline_mode<synchronous>, transform_indices = @transform_6, window_bounds = array<i64: 1, 32>}, {transform_indices = @transform_7, window_bounds = array<i64: 1, 4, 4, 32>}]} {
    %cst = arith.constant 0.000000e+00 : bf16
    %0 = vector.broadcast %cst : bf16 to vector<5x16xbf16>
    %c0 = arith.constant 0 : index
    %c0_0 = arith.constant 0 : index
    %c0_1 = arith.constant 0 : index
    %1 = vector.load %arg9[%c0, %c0_0, %c0_1] : memref<5x5x16xbf16, #tpu.memory_space<vmem>>, vector<1x5x16xbf16>
    %2 = vector.shape_cast %1 : vector<1x5x16xbf16> to vector<5x16xbf16>
    %3 = vector.shape_cast %0 : vector<5x16xbf16> to vector<1x5x16xbf16>
    tpu.vector_store %arg9[%c0, %c0_0, %c0_1], %3 {strides = array<i32>} : memref<5x5x16xbf16, #tpu.memory_space<vmem>>, vector<1x5x16xbf16>,
    %cst_2 = arith.constant 0.000000e+00 : bf16
    %4 = vector.broadcast %cst_2 : bf16 to vector<5x1x16xbf16>
    %c0_3 = arith.constant 0 : index
    %c0_4 = arith.constant 0 : index
    %c0_5 = arith.constant 0 : index
    %5 = vector.load %arg9[%c0_3, %c0_4, %c0_5] : memref<5x5x16xbf16, #tpu.memory_space<vmem>>, vector<5x1x16xbf16>
    tpu.vector_store %arg9[%c0_3, %c0_4, %c0_5], %4 {strides = array<i32>} : memref<5x5x16xbf16, #tpu.memory_space<vmem>>, vector<5x1x16xbf16>,
    %c0_6 = arith.constant 0 : index
    %c0_7 = arith.constant 0 : index
    %c0_8 = arith.constant 0 : index
    %c0_9 = arith.constant 0 : index
    %6 = vector.load %arg1[%c0_6, %c0_7, %c0_8, %c0_9] : memref<1x4x4x256xbf16, #tpu.memory_space<vmem>>, vector<1x4x4x256xbf16>
    %7 = vector.shape_cast %6 : vector<1x4x4x256xbf16> to vector<4x4x256xbf16>
    %8 = vector.shape_cast %7 : vector<4x4x256xbf16> to vector<16x256xbf16>
    %c0_10 = arith.constant 0 : index
    %c0_11 = arith.constant 0 : index
    %9 = vector.load %arg2[%c0_10, %c0_11] : memref<256x16xbf16, #tpu.memory_space<vmem>>, vector<256x16xbf16>
    %cst_12 = arith.constant dense<0.000000e+00> : vector<16x16xf32>
    %10 = tpu.matmul %8, %9, %cst_12 {dimension_numbers = #tpu.dot_dimension_numbers<[1], [0], [0], [1], [0, 0, 1, 1], [], []>} : vector<16x256xbf16>, vector<256x16xbf16>, vector<16x16xf32> -> vector<16x16xf32>
    %c0_13 = arith.constant 0 : index
    %c0_14 = arith.constant 0 : index
    %11 = vector.load %arg3[%c0_13, %c0_14] : memref<1x16xf32, #tpu.memory_space<vmem>>, vector<1x16xf32>
    %12 = vector.broadcast %11 : vector<1x16xf32> to vector<16x16xf32>
    %13 = arith.addf %10, %12 : vector<16x16xf32>
    %cst_15 = arith.constant 0.000000e+00 : f32
    %14 = vector.broadcast %cst_15 : f32 to vector<16x16xf32>
    %15 = arith.maximumf %13, %14 : vector<16x16xf32>
    %16 = vector.shape_cast %15 : vector<16x16xf32> to vector<4x4x16xf32>
    %17 = arith.truncf %16 : vector<4x4x16xf32> to vector<4x4x16xbf16>
    %c1 = arith.constant 1 : index
    %c1_16 = arith.constant 1 : index
    %c0_17 = arith.constant 0 : index
    %18 = vector.load %arg9[%c1, %c1_16, %c0_17] : memref<5x5x16xbf16, #tpu.memory_space<vmem>>, vector<4x4x16xbf16>
    tpu.vector_store %arg9[%c1, %c1_16, %c0_17], %17 {strides = array<i32>} : memref<5x5x16xbf16, #tpu.memory_space<vmem>>, vector<4x4x16xbf16>,
    %c0_18 = arith.constant 0 : index
    %c0_19 = arith.constant 0 : index
    %c0_20 = arith.constant 0 : index
    %19 = vector.load %arg9[%c0_18, %c0_19, %c0_20] : memref<5x5x16xbf16, #tpu.memory_space<vmem>>, vector<4x4x16xbf16>
    %20 = vector.shape_cast %19 : vector<4x4x16xbf16> to vector<16x16xbf16>
    %c0_21 = arith.constant 0 : index
    %c0_22 = arith.constant 0 : index
    %c0_23 = arith.constant 0 : index
    %c0_24 = arith.constant 0 : index
    %21 = vector.load %arg4[%c0_21, %c0_22, %c0_23, %c0_24] : memref<2x2x16x128xbf16, #tpu.memory_space<vmem>>, vector<1x1x16x128xbf16>
    %22 = vector.shape_cast %21 : vector<1x1x16x128xbf16> to vector<16x128xbf16>
    %cst_25 = arith.constant dense<0.000000e+00> : vector<16x128xf32>
    %23 = tpu.matmul %20, %22, %cst_25 {dimension_numbers = #tpu.dot_dimension_numbers<[1], [0], [0], [1], [0, 0, 1, 1], [], []>} : vector<16x16xbf16>, vector<16x128xbf16>, vector<16x128xf32> -> vector<16x128xf32>
    %c0_26 = arith.constant 0 : index
    %c1_27 = arith.constant 1 : index
    %c0_28 = arith.constant 0 : index
    %24 = vector.load %arg9[%c0_26, %c1_27, %c0_28] : memref<5x5x16xbf16, #tpu.memory_space<vmem>>, vector<4x4x16xbf16>
    %25 = vector.shape_cast %24 : vector<4x4x16xbf16> to vector<16x16xbf16>
    %c0_29 = arith.constant 0 : index
    %c1_30 = arith.constant 1 : index
    %c0_31 = arith.constant 0 : index
    %c0_32 = arith.constant 0 : index
    %26 = vector.load %arg4[%c0_29, %c1_30, %c0_31, %c0_32] : memref<2x2x16x128xbf16, #tpu.memory_space<vmem>>, vector<1x1x16x128xbf16>
    %27 = vector.shape_cast %26 : vector<1x1x16x128xbf16> to vector<16x128xbf16>
    %cst_33 = arith.constant dense<0.000000e+00> : vector<16x128xf32>
    %28 = tpu.matmul %25, %27, %cst_33 {dimension_numbers = #tpu.dot_dimension_numbers<[1], [0], [0], [1], [0, 0, 1, 1], [], []>} : vector<16x16xbf16>, vector<16x128xbf16>, vector<16x128xf32> -> vector<16x128xf32>
    %29 = arith.addf %23, %28 : vector<16x128xf32>
    %c1_34 = arith.constant 1 : index
    %c0_35 = arith.constant 0 : index
    %c0_36 = arith.constant 0 : index
    %30 = vector.load %arg9[%c1_34, %c0_35, %c0_36] : memref<5x5x16xbf16, #tpu.memory_space<vmem>>, vector<4x4x16xbf16>
    %31 = vector.shape_cast %30 : vector<4x4x16xbf16> to vector<16x16xbf16>
    %c1_37 = arith.constant 1 : index
    %c0_38 = arith.constant 0 : index
    %c0_39 = arith.constant 0 : index
    %c0_40 = arith.constant 0 : index
    %32 = vector.load %arg4[%c1_37, %c0_38, %c0_39, %c0_40] : memref<2x2x16x128xbf16, #tpu.memory_space<vmem>>, vector<1x1x16x128xbf16>
    %33 = vector.shape_cast %32 : vector<1x1x16x128xbf16> to vector<16x128xbf16>
    %cst_41 = arith.constant dense<0.000000e+00> : vector<16x128xf32>
    %34 = tpu.matmul %31, %33, %cst_41 {dimension_numbers = #tpu.dot_dimension_numbers<[1], [0], [0], [1], [0, 0, 1, 1], [], []>} : vector<16x16xbf16>, vector<16x128xbf16>, vector<16x128xf32> -> vector<16x128xf32>
    %35 = arith.addf %29, %34 : vector<16x128xf32>
    %c1_42 = arith.constant 1 : index
    %c1_43 = arith.constant 1 : index
    %c0_44 = arith.constant 0 : index
    %36 = vector.load %arg9[%c1_42, %c1_43, %c0_44] : memref<5x5x16xbf16, #tpu.memory_space<vmem>>, vector<4x4x16xbf16>
    %37 = vector.shape_cast %36 : vector<4x4x16xbf16> to vector<16x16xbf16>
    %c1_45 = arith.constant 1 : index
    %c1_46 = arith.constant 1 : index
    %c0_47 = arith.constant 0 : index
    %c0_48 = arith.constant 0 : index
    %38 = vector.load %arg4[%c1_45, %c1_46, %c0_47, %c0_48] : memref<2x2x16x128xbf16, #tpu.memory_space<vmem>>, vector<1x1x16x128xbf16>
    %39 = vector.shape_cast %38 : vector<1x1x16x128xbf16> to vector<16x128xbf16>
    %cst_49 = arith.constant dense<0.000000e+00> : vector<16x128xf32>
    %40 = tpu.matmul %37, %39, %cst_49 {dimension_numbers = #tpu.dot_dimension_numbers<[1], [0], [0], [1], [0, 0, 1, 1], [], []>} : vector<16x16xbf16>, vector<16x128xbf16>, vector<16x128xf32> -> vector<16x128xf32>
    %41 = arith.addf %35, %40 : vector<16x128xf32>
    %c0_50 = arith.constant 0 : index
    %c0_51 = arith.constant 0 : index
    %42 = vector.load %arg5[%c0_50, %c0_51] : memref<1x128xf32, #tpu.memory_space<vmem>>, vector<1x128xf32>
    %43 = vector.broadcast %42 : vector<1x128xf32> to vector<16x128xf32>
    %44 = arith.addf %41, %43 : vector<16x128xf32>
    %cst_52 = arith.constant 0.000000e+00 : f32
    %45 = vector.broadcast %cst_52 : f32 to vector<16x128xf32>
    %46 = arith.maximumf %44, %45 : vector<16x128xf32>
    %47 = arith.truncf %46 : vector<16x128xf32> to vector<16x128xbf16>
    %c0_53 = arith.constant 0 : index
    %c0_54 = arith.constant 0 : index
    %48 = vector.load %arg6[%c0_53, %c0_54] : memref<128x32xbf16, #tpu.memory_space<vmem>>, vector<128x32xbf16>
    %cst_55 = arith.constant dense<0.000000e+00> : vector<16x32xf32>
    %49 = tpu.matmul %47, %48, %cst_55 {dimension_numbers = #tpu.dot_dimension_numbers<[1], [0], [0], [1], [0, 0, 1, 1], [], []>} : vector<16x128xbf16>, vector<128x32xbf16>, vector<16x32xf32> -> vector<16x32xf32>
    %c0_56 = arith.constant 0 : index
    %c0_57 = arith.constant 0 : index
    %50 = vector.load %arg7[%c0_56, %c0_57] : memref<1x32xf32, #tpu.memory_space<vmem>>, vector<1x32xf32>
    %51 = vector.broadcast %50 : vector<1x32xf32> to vector<16x32xf32>
    %52 = arith.addf %49, %51 : vector<16x32xf32>
    %53 = vector.shape_cast %52 : vector<16x32xf32> to vector<4x4x32xf32>
    %54 = arith.truncf %53 : vector<4x4x32xf32> to vector<4x4x32xbf16>
    %c0_58 = arith.constant 0 : index
    %c0_59 = arith.constant 0 : index
    %c0_60 = arith.constant 0 : index
    %c0_61 = arith.constant 0 : index
    %55 = vector.load %arg8[%c0_58, %c0_59, %c0_60, %c0_61] : memref<1x4x4x32xbf16, #tpu.memory_space<vmem>>, vector<1x4x4x32xbf16>
    %56 = vector.shape_cast %55 : vector<1x4x4x32xbf16> to vector<4x4x32xbf16>
    %57 = vector.shape_cast %54 : vector<4x4x32xbf16> to vector<1x4x4x32xbf16>
    tpu.vector_store %arg8[%c0_58, %c0_59, %c0_60, %c0_61], %57 {strides = array<i32>} : memref<1x4x4x32xbf16, #tpu.memory_space<vmem>>, vector<1x4x4x32xbf16>,
    return
  }
  func.func @transform_0(%arg0: i32) -> (i32, i32, i32, i32) {
    %c0_i32 = arith.constant 0 : i32
    %c0_i32_0 = arith.constant 0 : i32
    %c0_i32_1 = arith.constant 0 : i32
    %c0_i32_2 = arith.constant 0 : i32
    return %arg0, %c0_i32, %c0_i32_0, %c0_i32_1 : i32, i32, i32, i32
  }
  func.func @transform_1(%arg0: i32) -> (i32, i32) {
    %c0_i32 = arith.constant 0 : i32
    %c0_i32_0 = arith.constant 0 : i32
    %c0_i32_1 = arith.constant 0 : i32
    return %c0_i32, %c0_i32_0 : i32, i32
  }
  func.func @transform_2(%arg0: i32) -> (i32, i32) {
    %c0_i32 = arith.constant 0 : i32
    %c0_i32_0 = arith.constant 0 : i32
    %c0_i32_1 = arith.constant 0 : i32
    return %c0_i32, %c0_i32_0 : i32, i32
  }
  func.func @transform_3(%arg0: i32) -> (i32, i32, i32, i32) {
    %c0_i32 = arith.constant 0 : i32
    %c0_i32_0 = arith.constant 0 : i32
    %c0_i32_1 = arith.constant 0 : i32
    %c0_i32_2 = arith.constant 0 : i32
    %c0_i32_3 = arith.constant 0 : i32
    return %c0_i32, %c0_i32_0, %c0_i32_1, %c0_i32_2 : i32, i32, i32, i32
  }
  func.func @transform_4(%arg0: i32) -> (i32, i32) {
    %c0_i32 = arith.constant 0 : i32
    %c0_i32_0 = arith.constant 0 : i32
    %c0_i32_1 = arith.constant 0 : i32
    return %c0_i32, %c0_i32_0 : i32, i32
  }
  func.func @transform_5(%arg0: i32) -> (i32, i32) {
    %c0_i32 = arith.constant 0 : i32
    %c0_i32_0 = arith.constant 0 : i32
    %c0_i32_1 = arith.constant 0 : i32
    return %c0_i32, %c0_i32_0 : i32, i32
  }
  func.func @transform_6(%arg0: i32) -> (i32, i32) {
    %c0_i32 = arith.constant 0 : i32
    %c0_i32_0 = arith.constant 0 : i32
    %c0_i32_1 = arith.constant 0 : i32
    return %c0_i32, %c0_i32_0 : i32, i32
  }
  func.func @transform_7(%arg0: i32) -> (i32, i32, i32, i32) {
    %c0_i32 = arith.constant 0 : i32
    %c0_i32_0 = arith.constant 0 : i32
    %c0_i32_1 = arith.constant 0 : i32
    %c0_i32_2 = arith.constant 0 : i32
    return %arg0, %c0_i32, %c0_i32_0, %c0_i32_1 : i32, i32, i32, i32
  }
}

</mosaic_0001>

<llo_original>
// kernel: tile.13
$region0: #{tile.13}
  #allocation0 [shape = 's32[1]{0}', space=sflag, size = 0x4, scoped, tag = 'scoped memory for tile.13']
  %s0 = inlined_call_operand.vmem [shape: f32[4], index: 0, kind: input, shape index: {}]
  %s1 = inlined_call_operand.vmem [shape: f32[4,4], index: 1, kind: output, shape index: {}]
  // Predicated region
  $region2: #{tile.13} parent=0 // pred_check
    _
  $region3: #{tile.13} parent=0 // pred_check_branch
    %3 = sbr.rel (0) target = $region5
  $region4: #{tile.13} parent=0 // pred_region
    _
  $region5: #{tile.13} parent=0 // pred_fallthru
    _
  %v4 = vld [vmem:[%s0] ss:$0 sm:$0xff]
  %5 = vst [vmem:[%s1] sm:$0xf] %v4

// kernel: mul.13
$region0: #{mul.13}
  %s0 = inlined_call_operand.vmem [shape: f32[4,4], index: 0, kind: input, shape index: {}]
  %s1 = inlined_call_operand.vmem [shape: f32[16], index: 1, kind: output, shape index: {}]
  $region1: #{mul.13} parent=0
    #allocation0 [shape = 'u8[4096]{0}', space=vmem, size = 0x1000, scoped, tag = 'scoped mem for output reshape']
    #allocation1 [shape = 'u8[4096]{0}', space=vmem, size = 0x1000, scoped, tag = 'scoped mem for input reshape']
    %s3 = sshllo.u32 0, 4
    %v4 = vld [vmem:[%s0] sm:%s3]
    %5 = vst [vmem:[#allocation1] sm:%s3] %v4
    %v6 = vld [vmem:[#allocation1] sm:$0x1]
    %vm7 = vcmask 31744
    %8 = vst.msk [vmem:[#allocation0] sm:$0x1] %vm7, %v6
    %s9 = scalar_lea.vmem [#allocation1], 3
    %v10 = vld [vmem:[%s9] sm:$0x1]
    %11 = vrot.lane.b32.xlu0 %v10, 12
    %v12 = vpop.permute.xlu0 %11
    %vm13 = vcmask 130144
    %14 = vst.msk [vmem:[#allocation0] sm:$0x1] %vm13, %v12
    %s15 = scalar_lea.vmem [#allocation1], 2
    %v16 = vld [vmem:[%s15] sm:$0x1]
    %17 = vrot.lane.b32.xlu0 %v16, 8
    %v18 = vpop.permute.xlu0 %17
    %vm19 = vcmask 97344
    %20 = vst.msk [vmem:[#allocation0] sm:$0x1] %vm19, %v18
    %s21 = scalar_lea.vmem [#allocation1], 1
    %v22 = vld [vmem:[%s21] sm:$0x1]
    %23 = vrot.lane.b32.xlu0 %v22, 4
    %v24 = vpop.permute.xlu0 %23
    %vm25 = vcmask 64544
    %26 = vst.msk [vmem:[#allocation0] sm:$0x1] %vm25, %v24
    %s28 = sshllo.u32 0, 1
    %v30 = vld [vmem:[#allocation0] sm:%s28]
    %s31 = sshllo.u32 0, 1
    %32 = vst [vmem:[%s1] sm:%s31] %v30

// kernel: tile.19
$region0: #{tile.19}
  %s0 = inlined_call_operand.vmem [shape: f32[4,4], index: 0, kind: input, shape index: {}]
  %s1 = inlined_call_operand.vmem [shape: f32[1,16], index: 1, kind: output, shape index: {}]
  $region1: #{tile.19} parent=0
    #allocation0 [shape = 'u8[4096]{0}', space=vmem, size = 0x1000, scoped, tag = 'scoped mem for output reshape']
    #allocation1 [shape = 'u8[4096]{0}', space=vmem, size = 0x1000, scoped, tag = 'scoped mem for input reshape']
    %s3 = sshllo.u32 0, 4
    %v4 = vld [vmem:[%s0] sm:%s3]
    %5 = vst [vmem:[#allocation1] sm:%s3] %v4
    %v6 = vld [vmem:[#allocation1] sm:$0x1]
    %vm7 = vcmask 31744
    %8 = vst.msk [vmem:[#allocation0] sm:$0x1] %vm7, %v6
    %s9 = scalar_lea.vmem [#allocation1], 3
    %v10 = vld [vmem:[%s9] sm:$0x1]
    %11 = vrot.lane.b32.xlu0 %v10, 12
    %v12 = vpop.permute.xlu0 %11
    %vm13 = vcmask 130144
    %14 = vst.msk [vmem:[#allocation0] sm:$0x1] %vm13, %v12
    %s15 = scalar_lea.vmem [#allocation1], 2
    %v16 = vld [vmem:[%s15] sm:$0x1]
    %17 = vrot.lane.b32.xlu0 %v16, 8
    %v18 = vpop.permute.xlu0 %17
    %vm19 = vcmask 97344
    %20 = vst.msk [vmem:[#allocation0] sm:$0x1] %vm19, %v18
    %s21 = scalar_lea.vmem [#allocation1], 1
    %v22 = vld [vmem:[%s21] sm:$0x1]
    %23 = vrot.lane.b32.xlu0 %v22, 4
    %v24 = vpop.permute.xlu0 %23
    %vm25 = vcmask 64544
    %26 = vst.msk [vmem:[#allocation0] sm:$0x1] %vm25, %v24
    %s28 = sshllo.u32 0, 1
    %v30 = vld [vmem:[#allocation0] sm:%s28]
    %s31 = sshllo.u32 0, 1
    %32 = vst [vmem:[%s1] sm:%s31] %v30

// kernel: convstem_forward.1
$region0: #{convstem_forward.1}
  #allocation0 [shape = 'u32[]', space=smem, size = 0x4, offset = 0x4, fixed_abs, tag = 'smem constant byte address 0x4 - core index']
  #allocation1 [shape = 'u32[144,128]{1,0:T(1,128)}', space=vmem, size = 0x12000, scoped, tag = 'internal scratch']
  #allocation2 [shape = 'bf16[5,5,16]{2,1,0:T(8,128)(2,1)}', space=vmem, size = 0x2800, scoped, tag = 'scratch operand']
  %s0 = inlined_call_operand.vmem [shape: bf16[2,4,4,256], index: 0, kind: input, shape index: {}]
  %s1 = inlined_call_operand.vmem [shape: bf16[256,16], index: 1, kind: input, shape index: {}]
  %s2 = inlined_call_operand.vmem [shape: f32[1,16], index: 2, kind: input, shape index: {}]
  %s3 = inlined_call_operand.vmem [shape: bf16[2,2,16,128], index: 3, kind: input, shape index: {}]
  %s4 = inlined_call_operand.vmem [shape: f32[1,128], index: 4, kind: input, shape index: {}]
  %s5 = inlined_call_operand.vmem [shape: bf16[128,32], index: 5, kind: input, shape index: {}]
  %s6 = inlined_call_operand.vmem [shape: f32[1,32], index: 6, kind: input, shape index: {}]
  %s7 = inlined_call_operand.hbm [shape: bf16[2,4,4,32], index: 7, kind: output, shape index: {}]
  %s8 = sld [smem:[#allocation0]]
  $region61: #{convstem_forward.1} parent=0
    _
  %s10 = ssub.s32 1, %s8
  %s11 = scalar_select 0, %s10, %s8
  $region1: #{convstem_forward.1} parent=0
    #allocation3 [shape = 'u8[8192]{0}', space=vmem, size = 0x2000, scoped, tag = 'output window, operand 0']
    #allocation4 [shape = 's32[2]{0}', space=sflag, size = 0x8, scoped, tag = 'scoped memory for convstem_forward.1']
    %12 = vsyncpa [#allocation4], 0
    %s13 = scalar_lea.sflag [#allocation4], 1
    %14 = vsyncpa %s13, 0
    loop: start=0, step=1, limit=4
    $region2: #{convstem_forward.1} parent=1 // loop_pre_header
      _
    $region3: #{convstem_forward.1} parent=1 // loop_header
      %s16 = sphi 0, %s20
      %p17 = scmp.ge.s32.totalorder %s16, 4
      %s26 = sphi 0, %s28
      %s29 = sphi 0, %s26
      %s30 = sphi 0, %s29
      %s46 = sphi 0, %s30
      %s50 = sphi 0, %s50
      %s52 = sphi 0, %s50
      %s53 = sphi 0, %s52
      %s67 = sphi 0, %s53
      %s71 = sphi 0, %s71
      %s73 = sphi 0, %s71
      %s74 = sphi 0, %s73
      %s88 = sphi 0, %s74
      %s92 = sphi 0, %s92
      %s94 = sphi 0, %s92
      %s95 = sphi 0, %s94
      %s109 = sphi 0, %s95
      %s113 = sphi 0, %s113
      %s115 = sphi 0, %s113
      %s116 = sphi 0, %s115
      %s130 = sphi 0, %s116
      %s134 = sphi 0, %s134
      %s136 = sphi 0, %s134
      %s137 = sphi 0, %s136
      %s151 = sphi 0, %s137
      %s155 = sphi 0, %s155
      %s157 = sphi 0, %s155
      %s158 = sphi 0, %s157
      %s172 = sphi 0, %s158
      %s178 = sphi 0, %s180
      %s181 = sphi 0, %s178
      %s182 = sphi 0, %s181
      %s198 = sphi 0, %s182
    $region4: #{convstem_forward.1} parent=1 // loop_header_branch
      %19 = sbr.rel (%p17) target = $region8
    $region5: #{convstem_forward.1} parent=1 // loop_body
      %s21 = ssub.s32 %s16, 1
      %s22 = ssub.s32 %s16, 2
      %s23 = sadd.s32 %s16, 1
      %s24 = ssub.s32 %s16, %s23
      %p25 = scmp.eq.s32.totalorder %s24, 0
      %s27 = sadd.s32 %s26, 1
      %s28 = scalar_select %p25, %s26, %s27
      %p31 = pneg %p25
      %p32 = scmp.eq.s32.totalorder %s16, 1
      %p33 = por %p31, %p32
      %p34 = scmp.ne.s32.totalorder %s26, %s29
      %p35 = scmp.eq.s32.totalorder %s16, 0
      %p36 = por %p34, %p35
      %p37 = scmp.ne.s32.totalorder %s26, %s29
      %p38 = scmp.eq.s32.totalorder %s21, 1
      %p39 = por %p37, %p38
      %p40 = scmp.ne.s32.totalorder %s29, %s30
      %p41 = scmp.eq.s32.totalorder %s21, 0
      %p42 = por %p40, %p41
      %p43 = scmp.ne.s32.totalorder %s29, %s30
      %p44 = scmp.eq.s32.totalorder %s22, 1
      %p45 = por %p43, %p44
      %p47 = scmp.ne.s32.totalorder %s30, %s46
      %p48 = scmp.eq.s32.totalorder %s22, 0
      %p49 = por %p47, %p48
      %s51 = sadd.s32 %s50, 1
      %p54 = scmp.eq.s32.totalorder %s16, 1
      %p55 = scmp.ne.s32.totalorder %s50, %s52
      %p56 = scmp.eq.s32.totalorder %s16, 0
      %p57 = por %p55, %p56
      %p58 = scmp.ne.s32.totalorder %s50, %s52
      %p59 = scmp.eq.s32.totalorder %s21, 1
      %p60 = por %p58, %p59
      %p61 = scmp.ne.s32.totalorder %s52, %s53
      %p62 = scmp.eq.s32.totalorder %s21, 0
      %p63 = por %p61, %p62
      %p64 = scmp.ne.s32.totalorder %s52, %s53
      %p65 = scmp.eq.s32.totalorder %s22, 1
      %p66 = por %p64, %p65
      %p68 = scmp.ne.s32.totalorder %s53, %s67
      %p69 = scmp.eq.s32.totalorder %s22, 0
      %p70 = por %p68, %p69
      %s72 = sadd.s32 %s71, 1
      %p75 = scmp.eq.s32.totalorder %s16, 1
      %p76 = scmp.ne.s32.totalorder %s71, %s73
      %p77 = scmp.eq.s32.totalorder %s16, 0
      %p78 = por %p76, %p77
      %p79 = scmp.ne.s32.totalorder %s71, %s73
      %p80 = scmp.eq.s32.totalorder %s21, 1
      %p81 = por %p79, %p80
      %p82 = scmp.ne.s32.totalorder %s73, %s74
      %p83 = scmp.eq.s32.totalorder %s21, 0
      %p84 = por %p82, %p83
      %p85 = scmp.ne.s32.totalorder %s73, %s74
      %p86 = scmp.eq.s32.totalorder %s22, 1
      %p87 = por %p85, %p86
      %p89 = scmp.ne.s32.totalorder %s74, %s88
      %p90 = scmp.eq.s32.totalorder %s22, 0
      %p91 = por %p89, %p90
      %s93 = sadd.s32 %s92, 1
      %p96 = scmp.eq.s32.totalorder %s16, 1
      %p97 = scmp.ne.s32.totalorder %s92, %s94
      %p98 = scmp.eq.s32.totalorder %s16, 0
      %p99 = por %p97, %p98
      %p100 = scmp.ne.s32.totalorder %s92, %s94
      %p101 = scmp.eq.s32.totalorder %s21, 1
      %p102 = por %p100, %p101
      %p103 = scmp.ne.s32.totalorder %s94, %s95
      %p104 = scmp.eq.s32.totalorder %s21, 0
      %p105 = por %p103, %p104
      %p106 = scmp.ne.s32.totalorder %s94, %s95
      %p107 = scmp.eq.s32.totalorder %s22, 1
      %p108 = por %p106, %p107
      %p110 = scmp.ne.s32.totalorder %s95, %s109
      %p111 = scmp.eq.s32.totalorder %s22, 0
      %p112 = por %p110, %p111
      %s114 = sadd.s32 %s113, 1
      %p117 = scmp.eq.s32.totalorder %s16, 1
      %p118 = scmp.ne.s32.totalorder %s113, %s115
      %p119 = scmp.eq.s32.totalorder %s16, 0
      %p120 = por %p118, %p119
      %p121 = scmp.ne.s32.totalorder %s113, %s115
      %p122 = scmp.eq.s32.totalorder %s21, 1
      %p123 = por %p121, %p122
      %p124 = scmp.ne.s32.totalorder %s115, %s116
      %p125 = scmp.eq.s32.totalorder %s21, 0
      %p126 = por %p124, %p125
      %p127 = scmp.ne.s32.totalorder %s115, %s116
      %p128 = scmp.eq.s32.totalorder %s22, 1
      %p129 = por %p127, %p128
      %p131 = scmp.ne.s32.totalorder %s116, %s130
      %p132 = scmp.eq.s32.totalorder %s22, 0
      %p133 = por %p131, %p132
      %s135 = sadd.s32 %s134, 1
      %p138 = scmp.eq.s32.totalorder %s16, 1
      %p139 = scmp.ne.s32.totalorder %s134, %s136
      %p140 = scmp.eq.s32.totalorder %s16, 0
      %p141 = por %p139, %p140
      %p142 = scmp.ne.s32.totalorder %s134, %s136
      %p143 = scmp.eq.s32.totalorder %s21, 1
      %p144 = por %p142, %p143
      %p145 = scmp.ne.s32.totalorder %s136, %s137
      %p146 = scmp.eq.s32.totalorder %s21, 0
      %p147 = por %p145, %p146
      %p148 = scmp.ne.s32.totalorder %s136, %s137
      %p149 = scmp.eq.s32.totalorder %s22, 1
      %p150 = por %p148, %p149
      %p152 = scmp.ne.s32.totalorder %s137, %s151
      %p153 = scmp.eq.s32.totalorder %s22, 0
      %p154 = por %p152, %p153
      %s156 = sadd.s32 %s155, 1
      %p159 = scmp.eq.s32.totalorder %s16, 1
      %p160 = scmp.ne.s32.totalorder %s155, %s157
      %p161 = scmp.eq.s32.totalorder %s16, 0
      %p162 = por %p160, %p161
      %p163 = scmp.ne.s32.totalorder %s155, %s157
      %p164 = scmp.eq.s32.totalorder %s21, 1
      %p165 = por %p163, %p164
      %p166 = scmp.ne.s32.totalorder %s157, %s158
      %p167 = scmp.eq.s32.totalorder %s21, 0
      %p168 = por %p166, %p167
      %p169 = scmp.ne.s32.totalorder %s157, %s158
      %p170 = scmp.eq.s32.totalorder %s22, 1
      %p171 = por %p169, %p170
      %p173 = scmp.ne.s32.totalorder %s158, %s172
      %p174 = scmp.eq.s32.totalorder %s22, 0
      %p175 = por %p173, %p174
      %s176 = ssub.s32 %s16, %s23
      %p177 = scmp.eq.s32.totalorder %s176, 0
      %s179 = sadd.s32 %s178, 1
      %s180 = scalar_select %p177, %s178, %s179
      %p183 = pneg %p177
      %p184 = scmp.eq.s32.totalorder %s16, 1
      %p185 = por %p183, %p184
      %p186 = scmp.ne.s32.totalorder %s178, %s181
      %p187 = scmp.eq.s32.totalorder %s16, 0
      %p188 = por %p186, %p187
      %p189 = scmp.ne.s32.totalorder %s178, %s181
      %p190 = scmp.eq.s32.totalorder %s21, 1
      %p191 = por %p189, %p190
      %p192 = scmp.ne.s32.totalorder %s181, %s182
      %p193 = scmp.eq.s32.totalorder %s21, 0
      %p194 = por %p192, %p193
      %p195 = scmp.ne.s32.totalorder %s181, %s182
      %p196 = scmp.eq.s32.totalorder %s22, 1
      %p197 = por %p195, %p196
      %p199 = scmp.ne.s32.totalorder %s182, %s198
      %p200 = scmp.eq.s32.totalorder %s22, 0
      %p201 = por %p199, %p200
      %p202 = scmp.le.s32.totalorder 1, %s16
      %p203 = scmp.lt.s32.totalorder %s16, 3
      %p204 = pnand %p202, %p203
      %p205 = pneg %p204
      // Predicated region
      $region9: #{convstem_forward.1} parent=5 // pred_check
        _
      $region10: #{convstem_forward.1} parent=5 // pred_check_branch
        %207 = sbr.rel (%p204) target = $region12
      $region11: #{convstem_forward.1} parent=5 // pred_region
        %s208 = ssub.s32 %s16, 1
        // Predicated region
        $region13: #{convstem_forward.1} parent=11 // pred_check
          %p209 = pneg %p63
        $region14: #{convstem_forward.1} parent=11 // pred_check_branch
          %211 = sbr.rel (%p209) target = $region16
        $region15: #{convstem_forward.1} parent=11 // pred_region
          _
        $region16: #{convstem_forward.1} parent=11 // pred_fallthru
          _
        // Predicated region
        $region17: #{convstem_forward.1} parent=11 // pred_check
          %p212 = pneg %p84
        $region18: #{convstem_forward.1} parent=11 // pred_check_branch
          %214 = sbr.rel (%p212) target = $region20
        $region19: #{convstem_forward.1} parent=11 // pred_region
          _
        $region20: #{convstem_forward.1} parent=11 // pred_fallthru
          _
        // Predicated region
        $region21: #{convstem_forward.1} parent=11 // pred_check
          %p215 = pneg %p105
        $region22: #{convstem_forward.1} parent=11 // pred_check_branch
          %217 = sbr.rel (%p215) target = $region24
        $region23: #{convstem_forward.1} parent=11 // pred_region
          _
        $region24: #{convstem_forward.1} parent=11 // pred_fallthru
          _
        // Predicated region
        $region25: #{convstem_forward.1} parent=11 // pred_check
          %p218 = pneg %p126
        $region26: #{convstem_forward.1} parent=11 // pred_check_branch
          %220 = sbr.rel (%p218) target = $region28
        $region27: #{convstem_forward.1} parent=11 // pred_region
          _
        $region28: #{convstem_forward.1} parent=11 // pred_fallthru
          _
        // Predicated region
        $region29: #{convstem_forward.1} parent=11 // pred_check
          %p221 = pneg %p147
        $region30: #{convstem_forward.1} parent=11 // pred_check_branch
          %223 = sbr.rel (%p221) target = $region32
        $region31: #{convstem_forward.1} parent=11 // pred_region
          _
        $region32: #{convstem_forward.1} parent=11 // pred_fallthru
          _
        // Predicated region
        $region33: #{convstem_forward.1} parent=11 // pred_check
          %p224 = pneg %p168
        $region34: #{convstem_forward.1} parent=11 // pred_check_branch
          %226 = sbr.rel (%p224) target = $region36
        $region35: #{convstem_forward.1} parent=11 // pred_region
          _
        $region36: #{convstem_forward.1} parent=11 // pred_fallthru
          _
      $region12: #{convstem_forward.1} parent=5 // pred_fallthru
        _
      %p227 = scmp.lt.s32.totalorder %s16, 2
      // Predicated region
      $region37: #{convstem_forward.1} parent=5 // pred_check
        %p228 = pneg %p227
      $region38: #{convstem_forward.1} parent=5 // pred_check_branch
        %230 = sbr.rel (%p228) target = $region40
      $region39: #{convstem_forward.1} parent=5 // pred_region
        // Predicated region
        $region41: #{convstem_forward.1} parent=39 // pred_check
          %p231 = pneg %p36
        $region42: #{convstem_forward.1} parent=39 // pred_check_branch
          %233 = sbr.rel (%p231) target = $region44
        $region43: #{convstem_forward.1} parent=39 // pred_region
          %p234 = scmp.lt.s32.totalorder %s16, 1
          %s235 = scalar_select %p234, %s16, 1
          %s236 = smul.addr %s235, 8
          %s237 = smul.addr %s236, 2
          %s238 = scalar_lea.vmem %s0, %s237
        $region44: #{convstem_forward.1} parent=39 // pred_fallthru
          _
      $region40: #{convstem_forward.1} parent=5 // pred_fallthru
        _
      %p239 = scmp.le.s32.totalorder 1, %s16
      %p240 = scmp.lt.s32.totalorder %s16, 3
      %p241 = pnand %p239, %p240
      %p242 = pneg %p241
      // Predicated region
      $region45: #{convstem_forward.1} parent=5 // pred_check
        _
      $region46: #{convstem_forward.1} parent=5 // pred_check_branch
        %244 = sbr.rel (%p241) target = $region48
      $region47: #{convstem_forward.1} parent=5 // pred_region
        %s245 = ssub.s32 %s16, 1
        %p246 = scmp.lt.s32.totalorder %s21, 1
        %s247 = scalar_select %p246, %s21, 1
        %s248 = smul.addr %s247, 8
        %s249 = smul.addr %s248, 2
        %s250 = scalar_lea.vmem %s0, %s249
        %p251 = pneg %p42
        %p252 = pneg %p39
        %p253 = pneg %p63
        %p254 = pneg %p60
        %p255 = pneg %p84
        %p256 = pneg %p81
        %p257 = pneg %p105
        %p258 = pneg %p102
        %p259 = pneg %p126
        %p260 = pneg %p123
        %p261 = pneg %p147
        %p262 = pneg %p144
        %p263 = pneg %p168
        %p264 = pneg %p165
        %p265 = pneg %p194
        %p266 = pneg %p191
        %s267 = sand.u32 %s181, 1
        %s268 = scalar_lea.sflag [#allocation4], %s267
        %s269 = sand.u32 %s181, 1
        %s270 = smul.addr %s269, 8
        %s271 = scalar_lea.vmem [#allocation3], %s270
        %p272 = scmp.lt.s32.totalorder %s21, 1
        %s273 = scalar_select %p272, %s21, 1
        %s274 = smul.addr %s273, 8
        %s275 = smul.addr %s274, 2
        %s276 = scalar_lea.vmem %s0, %s275
        %vm278 = vcmask 124928
        %vm279 = vsmask.f32 2304
        %vm280 = vmand %vm278, %vm279
        %v281 = vld [vmem:[#allocation2] sm:$0x7]
        %v282 = vsel %vm280, 0, %v281
        %283 = vst [vmem:[#allocation2] sm:$0x7] %v282
        %vm284 = vcmask 122880
        %vm285 = vsmask.f32 256
        %vm286 = vmand %vm284, %vm285
        %v287 = vld [vmem:[#allocation2] sm:$0x1]
        %v288 = vsel %vm286, 0, %v287
        %289 = vst [vmem:[#allocation2] sm:$0x1] %v288
        %v290 = vld [vmem:[#allocation2 + $0x4] sm:$0x1]
        %v291 = vsel %vm286, 0, %v290
        %292 = vst [vmem:[#allocation2 + $0x4] sm:$0x1] %v291
        %v293 = vld [vmem:[#allocation2 + $0x8] sm:$0x1]
        %v294 = vsel %vm286, 0, %v293
        %295 = vst [vmem:[#allocation2 + $0x8] sm:$0x1] %v294
        %v296 = vld [vmem:[#allocation2 + $0xc] sm:$0x1]
        %v297 = vsel %vm286, 0, %v296
        %298 = vst [vmem:[#allocation2 + $0xc] sm:$0x1] %v297
        %v299 = vld [vmem:[#allocation2 + $0x10] sm:$0x1]
        %v300 = vsel %vm286, 0, %v299
        %301 = vst [vmem:[#allocation2 + $0x10] sm:$0x1] %v300
        %v302 = vld [vmem:[%s276] sm:$0xf]
        %v303 = vld [vmem:[%s276 + $0x4] sm:$0xf]
        %v304 = vld [vmem:[%s276 + $0x8] sm:$0xf]
        %v305 = vld [vmem:[%s276 + $0xc] sm:$0xf]
        %v306 = vld [vmem:[%s1] sm:$0xf]
        %v307 = vld [vmem:[%s1 + $0x4] sm:$0xf]
        %v308 = vld [vmem:[%s1 + $0x8] sm:$0xf]
        %v309 = vld [vmem:[%s1 + $0xc] sm:$0xf]
        %v310 = vld [vmem:[%s1 + $0x10] sm:$0xf]
        %v311 = vld [vmem:[%s1 + $0x14] sm:$0xf]
        %v312 = vld [vmem:[%s1 + $0x18] sm:$0xf]
        %v313 = vld [vmem:[%s1 + $0x1c] sm:$0xf]
        %v314 = vld [vmem:[%s1 + $0x20] sm:$0xf]
        %v315 = vld [vmem:[%s1 + $0x24] sm:$0xf]
        %v316 = vld [vmem:[%s1 + $0x28] sm:$0xf]
        %v317 = vld [vmem:[%s1 + $0x2c] sm:$0xf]
        %v318 = vld [vmem:[%s1 + $0x30] sm:$0xf]
        %v319 = vld [vmem:[%s1 + $0x34] sm:$0xf]
        %v320 = vld [vmem:[%s1 + $0x38] sm:$0xf]
        %v321 = vld [vmem:[%s1 + $0x3c] sm:$0xf]
        %v322 = vld [vmem:[%s1 + $0x40] sm:$0xf]
        %v323 = vld [vmem:[%s1 + $0x44] sm:$0xf]
        %v324 = vld [vmem:[%s1 + $0x48] sm:$0xf]
        %v325 = vld [vmem:[%s1 + $0x4c] sm:$0xf]
        %v326 = vld [vmem:[%s1 + $0x50] sm:$0xf]
        %v327 = vld [vmem:[%s1 + $0x54] sm:$0xf]
        %v328 = vld [vmem:[%s1 + $0x58] sm:$0xf]
        %v329 = vld [vmem:[%s1 + $0x5c] sm:$0xf]
        %v330 = vld [vmem:[%s1 + $0x60] sm:$0xf]
        %v331 = vld [vmem:[%s1 + $0x64] sm:$0xf]
        %v332 = vld [vmem:[%s1 + $0x68] sm:$0xf]
        %v333 = vld [vmem:[%s1 + $0x6c] sm:$0xf]
        %v334 = vld [vmem:[%s1 + $0x70] sm:$0xf]
        %v335 = vld [vmem:[%s1 + $0x74] sm:$0xf]
        %v336 = vld [vmem:[%s1 + $0x78] sm:$0xf]
        %v337 = vld [vmem:[%s1 + $0x7c] sm:$0xf]
        %v338 = vld [vmem:[%s2] sm:$0x1]
        %v340 = vlaneseq
        %v341 = vshrl.u32 %v340, 7
        %v342 = vsub.s32 0, %v341
        %v343 = vrot.slane %v338, %v342
        %v349 = vcombine.low %v302, %v303
        %v350 = vcombine.low %v304, %v305
        %v352 = vunpack.c.l.s4 1983009808
        %v353 = vunpack.c.0.s8 %v352
        %v354 = vlaneseq
        %v355 = vshrl.u32 %v354, 7
        %v356 = vsub.s32 %v353, %v355
        %v357 = vrot.slane %v349, %v356
        %v359 = vunpack.c.l.s4 1983009808
        %v360 = vunpack.c.0.s8 %v359
        %v361 = vlaneseq
        %v362 = vshrl.u32 %v361, 7
        %v363 = vsub.s32 %v360, %v362
        %v364 = vrot.slane %v350, %v363
        %v365 = vcombine.low %v357, %v364
        %v366 = vcombine.high %v357, %v364
        %v401 = vunpack.c.l.b16 %v306
        %v402 = vunpack.c.l.b16 %v307
        %v403 = vunpack.c.l.b16 %v308
        %v404 = vunpack.c.l.b16 %v309
        %v405 = vunpack.c.l.b16 %v310
        %v406 = vunpack.c.l.b16 %v311
        %v407 = vunpack.c.l.b16 %v312
        %v408 = vunpack.c.l.b16 %v313
        %v409 = vunpack.c.l.b16 %v314
        %v410 = vunpack.c.l.b16 %v315
        %v411 = vunpack.c.l.b16 %v316
        %v412 = vunpack.c.l.b16 %v317
        %v413 = vunpack.c.l.b16 %v318
        %v414 = vunpack.c.l.b16 %v319
        %v415 = vunpack.c.l.b16 %v320
        %v416 = vunpack.c.l.b16 %v321
        %v417 = vunpack.c.l.b16 %v322
        %v418 = vunpack.c.l.b16 %v323
        %v419 = vunpack.c.l.b16 %v324
        %v420 = vunpack.c.l.b16 %v325
        %v421 = vunpack.c.l.b16 %v326
        %v422 = vunpack.c.l.b16 %v327
        %v423 = vunpack.c.l.b16 %v328
        %v424 = vunpack.c.l.b16 %v329
        %v425 = vunpack.c.l.b16 %v330
        %v426 = vunpack.c.l.b16 %v331
        %v427 = vunpack.c.l.b16 %v332
        %v428 = vunpack.c.l.b16 %v333
        %v429 = vunpack.c.l.b16 %v334
        %v430 = vunpack.c.l.b16 %v335
        %v431 = vunpack.c.l.b16 %v336
        %v432 = vunpack.c.l.b16 %v337
        %v433 = vpack.c.b16 %v402, %v401
        %v434 = vpack.c.b16 %v404, %v403
        %v435 = vpack.c.b16 %v406, %v405
        %v436 = vpack.c.b16 %v408, %v407
        %v437 = vpack.c.b16 %v410, %v409
        %v438 = vpack.c.b16 %v412, %v411
        %v439 = vpack.c.b16 %v414, %v413
        %v440 = vpack.c.b16 %v416, %v415
        %v441 = vpack.c.b16 %v418, %v417
        %v442 = vpack.c.b16 %v420, %v419
        %v443 = vpack.c.b16 %v422, %v421
        %v444 = vpack.c.b16 %v424, %v423
        %v445 = vpack.c.b16 %v426, %v425
        %v446 = vpack.c.b16 %v428, %v427
        %v447 = vpack.c.b16 %v430, %v429
        %v448 = vpack.c.b16 %v432, %v431
        %465 = vmatprep.subr.bf16.mxu0 0
        %466 = vmatpush1.bf16.msra.mxu0 %v433
        %467 = vmatprep.subr.bf16.mxu0 0
        %468 = vmatpush1.bf16.msra.mxu0 %v434
        %469 = vmatprep.subr.bf16.mxu0 0
        %470 = vmatpush1.bf16.msra.mxu0 %v435
        %471 = vmatprep.subr.bf16.mxu0 0
        %472 = vmatpush1.bf16.msra.mxu0 %v436
        %473 = vmatprep.subr.bf16.mxu0 0
        %474 = vmatpush1.bf16.msra.mxu0 %v437
        %475 = vmatprep.subr.bf16.mxu0 0
        %476 = vmatpush1.bf16.msra.mxu0 %v438
        %477 = vmatprep.subr.bf16.mxu0 0
        %478 = vmatpush1.bf16.msra.mxu0 %v439
        %479 = vmatprep.subr.bf16.mxu0 0
        %480 = vmatpush1.bf16.msra.mxu0 %v440
        %481 = vmatprep.subr.bf16.mxu0 0
        %482 = vmatpush1.bf16.msra.mxu0 %v441
        %483 = vmatprep.subr.bf16.mxu0 0
        %484 = vmatpush1.bf16.msra.mxu0 %v442
        %485 = vmatprep.subr.bf16.mxu0 0
        %486 = vmatpush1.bf16.msra.mxu0 %v443
        %487 = vmatprep.subr.bf16.mxu0 0
        %488 = vmatpush1.bf16.msra.mxu0 %v444
        %489 = vmatprep.subr.bf16.mxu0 0
        %490 = vmatpush1.bf16.msra.mxu0 %v445
        %491 = vmatprep.subr.bf16.mxu0 0
        %492 = vmatpush1.bf16.msra.mxu0 %v446
        %493 = vmatprep.subr.bf16.mxu0 0
        %494 = vmatpush1.bf16.msra.mxu0 %v447
        %495 = vmatprep.subr.bf16.mxu0 0
        %496 = vmatpush1.bf16.msra.mxu0 %v448
        %497 = vmatprep.mubr.bf16.mxu0 %v366
        %498 = vmatmul.mubr.bf16.gmra.mrb[0].mxu0 %v365
        %v499 = vpop.f32.mrb[0].mxu0
        %v500 = vadd.f32 %v343, %v499
        %v501 = vpop.f32.mrb[0].mxu0
        %v502 = vpop.f32.mrb[0].mxu0
        %v503 = vadd.f32 %v343, %v502
        %v504 = vpop.f32.mrb[0].mxu0
        %505 = vdwg.mxu0
        %v506 = vmax.f32 %v500, 0.0
        %v507 = vmax.f32 %v503, 0.0
        %v510 = vcombine.high %v506, %v506
        %v511 = vcombine.high %v507, %v507
        %v514 = vpack.c.bf16 %v506, %v506
        %v515 = vpack.c.bf16 %v510, %v510
        %v516 = vpack.c.bf16 %v507, %v507
        %v517 = vpack.c.bf16 %v511, %v511
        %v522 = vunpack.c.l.b16 %v514
        %v523 = vunpack.c.l.b16 %v515
        %v524 = vunpack.c.l.b16 %v516
        %v525 = vunpack.c.l.b16 %v517
        %v526 = vpack.c.b16 %v522, %v522
        %v527 = vpack.c.b16 %v523, %v523
        %v528 = vpack.c.b16 %v524, %v524
        %v529 = vpack.c.b16 %v525, %v525
        %v531 = vshrl.u32 %v526, 16
        %v533 = vrot.slane %v531, 7
        %v534 = vshll.u32 %v526, 16
        %v536 = vor.u32 %v533, %v534
        %v538 = vshrl.u32 %v527, 16
        %v540 = vrot.slane %v538, 7
        %v541 = vshll.u32 %v527, 16
        %v543 = vor.u32 %v540, %v541
        %v545 = vshrl.u32 %v528, 16
        %v547 = vrot.slane %v545, 7
        %v548 = vshll.u32 %v528, 16
        %v550 = vor.u32 %v547, %v548
        %v552 = vshrl.u32 %v529, 16
        %v554 = vrot.slane %v552, 7
        %v555 = vshll.u32 %v529, 16
        %v557 = vor.u32 %v554, %v555
        %s562 = scalar_lea.vmem [#allocation2], 4
        %vm563 = vsmask.f32 2306
        %vm564 = vmand %vm278, %vm563
        %v565 = vld [vmem:[%s562] sm:$0x7]
        %v566 = vsel %vm564, %v536, %v565
        %567 = vst [vmem:[%s562] sm:$0x7] %v566
        %v568 = vld [vmem:[%s562 + $0x4] sm:$0x7]
        %v569 = vsel %vm564, %v543, %v568
        %570 = vst [vmem:[%s562 + $0x4] sm:$0x7] %v569
        %v571 = vld [vmem:[%s562 + $0x8] sm:$0x7]
        %v572 = vsel %vm564, %v550, %v571
        %573 = vst [vmem:[%s562 + $0x8] sm:$0x7] %v572
        %v574 = vld [vmem:[%s562 + $0xc] sm:$0x7]
        %v575 = vsel %vm564, %v557, %v574
        %576 = vst [vmem:[%s562 + $0xc] sm:$0x7] %v575
        %v577 = vld [vmem:[#allocation2] sm:$0x3]
        %v578 = vld [vmem:[#allocation2 + $0x4] sm:$0x3]
        %v579 = vld [vmem:[#allocation2 + $0x8] sm:$0x3]
        %v580 = vld [vmem:[#allocation2 + $0xc] sm:$0x3]
        %v581 = vld [vmem:[%s3] sm:$0xf]
        %v582 = vld [vmem:[%s3 + $0x4] sm:$0xf]
        %v583 = vld [vmem:[#allocation2] sm:$0x7]
        %v584 = vld [vmem:[#allocation2 + $0x4] sm:$0x7]
        %v585 = vld [vmem:[#allocation2 + $0x8] sm:$0x7]
        %v586 = vld [vmem:[#allocation2 + $0xc] sm:$0x7]
        %v592 = vunpack.c.l.s4 1983009808
        %v593 = vunpack.c.0.s8 %v592
        %v594 = vlaneseq
        %v595 = vshrl.u32 %v594, 7
        %v596 = vsub.s32 %v593, %v595
        %v597 = vrot.slane %v583, %v596
        %v598 = vcombine.high %v597, %v597
        %v600 = vunpack.c.l.s4 1983009808
        %v601 = vunpack.c.0.s8 %v600
        %v602 = vlaneseq
        %v603 = vshrl.u32 %v602, 7
        %v604 = vsub.s32 %v601, %v603
        %v605 = vrot.slane %v584, %v604
        %v606 = vcombine.high %v605, %v605
        %v608 = vunpack.c.l.s4 1983009808
        %v609 = vunpack.c.0.s8 %v608
        %v610 = vlaneseq
        %v611 = vshrl.u32 %v610, 7
        %v612 = vsub.s32 %v609, %v611
        %v613 = vrot.slane %v585, %v612
        %v614 = vcombine.high %v613, %v613
        %v616 = vunpack.c.l.s4 1983009808
        %v617 = vunpack.c.0.s8 %v616
        %v618 = vlaneseq
        %v619 = vshrl.u32 %v618, 7
        %v620 = vsub.s32 %v617, %v619
        %v621 = vrot.slane %v586, %v620
        %v622 = vcombine.high %v621, %v621
        %vm623 = vsmask.f32 1280
        %vm624 = vsmask.f32 3336
        %vm625 = vmor %vm623, %vm624
        %vm626 = vsmask.f32 5392
        %vm627 = vmor %vm625, %vm626
        %vm628 = vsmask.f32 7448
        %vm629 = vmor %vm627, %vm628
        %v631 = vshrl.u32 %v597, 16
        %v633 = vrot.slane %v631, 6
        %v634 = vshll.u32 %v597, 16
        %v636 = vrot.slane %v634, 7
        %v637 = vor.u32 %v633, %v636
        %v638 = vrot.slane %v637, 2
        %v640 = vshll.u32 %v598, 16
        %v642 = vrot.slane %v640, 7
        %v643 = vsel %vm629, %v638, %v642
        %v645 = vshrl.u32 %v605, 16
        %v647 = vrot.slane %v645, 6
        %v648 = vshll.u32 %v605, 16
        %v650 = vrot.slane %v648, 7
        %v651 = vor.u32 %v647, %v650
        %v652 = vrot.slane %v651, 2
        %v654 = vshll.u32 %v606, 16
        %v656 = vrot.slane %v654, 7
        %v657 = vsel %vm629, %v652, %v656
        %v659 = vshrl.u32 %v613, 16
        %v661 = vrot.slane %v659, 6
        %v662 = vshll.u32 %v613, 16
        %v664 = vrot.slane %v662, 7
        %v665 = vor.u32 %v661, %v664
        %v666 = vrot.slane %v665, 2
        %v668 = vshll.u32 %v614, 16
        %v670 = vrot.slane %v668, 7
        %v671 = vsel %vm629, %v666, %v670
        %v673 = vshrl.u32 %v621, 16
        %v675 = vrot.slane %v673, 6
        %v676 = vshll.u32 %v621, 16
        %v678 = vrot.slane %v676, 7
        %v679 = vor.u32 %v675, %v678
        %v680 = vrot.slane %v679, 2
        %v682 = vshll.u32 %v622, 16
        %v684 = vrot.slane %v682, 7
        %v685 = vsel %vm629, %v680, %v684
        %s686 = scalar_lea.vmem %s3, 8
        %v687 = vld [vmem:[%s686] sm:$0xf]
        %v688 = vld [vmem:[%s686 + $0x4] sm:$0xf]
        %v689 = vcombine.low %v643, %v657
        %v690 = vcombine.low %v671, %v685
        %v692 = vunpack.c.l.s4 1983009808
        %v693 = vunpack.c.0.s8 %v692
        %v694 = vlaneseq
        %v695 = vshrl.u32 %v694, 7
        %v696 = vsub.s32 %v693, %v695
        %v697 = vrot.slane %v689, %v696
        %v699 = vunpack.c.l.s4 1983009808
        %v700 = vunpack.c.0.s8 %v699
        %v701 = vlaneseq
        %v702 = vshrl.u32 %v701, 7
        %v703 = vsub.s32 %v700, %v702
        %v704 = vrot.slane %v690, %v703
        %v705 = vcombine.low %v697, %v704
        %v708 = vunpack.c.l.b16 %v687
        %v709 = vunpack.c.l.b16 %v688
        %v710 = vpack.c.b16 %v709, %v708
        %vm712 = vcmask 130048
        %v714 = vsel %vm712, %v705, 0
        %716 = vmatprep.subr.bf16.mxu0 0
        %717 = vmatpush1.bf16.msra.mxu0 %v710
        %718 = vmatprep.subr.bf16.mxu0 0
        %719 = vmatpush1.bf16.msra.mxu0 0
        %720 = vmatprep.subr.bf16.mxu0 0
        %721 = vmatpush1.bf16.msra.mxu0 0
        %722 = vmatprep.subr.bf16.mxu0 0
        %723 = vmatpush1.bf16.msra.mxu0 0
        %724 = vmatprep.subr.bf16.mxu0 0
        %725 = vmatpush1.bf16.msra.mxu0 0
        %726 = vmatprep.subr.bf16.mxu0 0
        %727 = vmatpush1.bf16.msra.mxu0 0
        %728 = vmatprep.subr.bf16.mxu0 0
        %729 = vmatpush1.bf16.msra.mxu0 0
        %730 = vmatprep.subr.bf16.mxu0 0
        %731 = vmatpush1.bf16.msra.mxu0 0
        %732 = vmatprep.subr.bf16.mxu0 0
        %733 = vmatpush1.bf16.msra.mxu0 0
        %734 = vmatprep.subr.bf16.mxu0 0
        %735 = vmatpush1.bf16.msra.mxu0 0
        %736 = vmatprep.subr.bf16.mxu0 0
        %737 = vmatpush1.bf16.msra.mxu0 0
        %738 = vmatprep.subr.bf16.mxu0 0
        %739 = vmatpush1.bf16.msra.mxu0 0
        %740 = vmatprep.subr.bf16.mxu0 0
        %741 = vmatpush1.bf16.msra.mxu0 0
        %742 = vmatprep.subr.bf16.mxu0 0
        %743 = vmatpush1.bf16.msra.mxu0 0
        %744 = vmatprep.subr.bf16.mxu0 0
        %745 = vmatpush1.bf16.msra.mxu0 0
        %746 = vmatprep.subr.bf16.mxu0 0
        %747 = vmatpush1.bf16.msra.mxu0 0
        %748 = vmatprep.mubr.bf16.mxu0 0
        %749 = vmatmul.mubr.bf16.gmra.mrb[0].mxu0 %v714
        %v750 = vpop.f32.mrb[0].mxu0
        %v751 = vadd.f32 0.0, %v750
        %v752 = vpop.f32.mrb[0].mxu0
        %v753 = vpop.f32.mrb[0].mxu0
        %v754 = vadd.f32 0.0, %v753
        %v755 = vpop.f32.mrb[0].mxu0
        %756 = vdwg.mxu0
        %v761 = vcombine.low %v577, %v578
        %v762 = vcombine.low %v579, %v580
        %v764 = vunpack.c.l.s4 1983009808
        %v765 = vunpack.c.0.s8 %v764
        %v766 = vlaneseq
        %v767 = vshrl.u32 %v766, 7
        %v768 = vsub.s32 %v765, %v767
        %v769 = vrot.slane %v761, %v768
        %v771 = vunpack.c.l.s4 1983009808
        %v772 = vunpack.c.0.s8 %v771
        %v773 = vlaneseq
        %v774 = vshrl.u32 %v773, 7
        %v775 = vsub.s32 %v772, %v774
        %v776 = vrot.slane %v762, %v775
        %v777 = vcombine.low %v769, %v776
        %v780 = vunpack.c.l.b16 %v581
        %v781 = vunpack.c.l.b16 %v582
        %v782 = vpack.c.b16 %v781, %v780
        %v785 = vsel %vm712, %v777, 0
        %787 = vmatprep.subr.bf16.mxu0 0
        %788 = vmatpush1.bf16.msra.mxu0 %v782
        %789 = vmatprep.subr.bf16.mxu0 0
        %790 = vmatpush1.bf16.msra.mxu0 0
        %791 = vmatprep.subr.bf16.mxu0 0
        %792 = vmatpush1.bf16.msra.mxu0 0
        %793 = vmatprep.subr.bf16.mxu0 0
        %794 = vmatpush1.bf16.msra.mxu0 0
        %795 = vmatprep.subr.bf16.mxu0 0
        %796 = vmatpush1.bf16.msra.mxu0 0
        %797 = vmatprep.subr.bf16.mxu0 0
        %798 = vmatpush1.bf16.msra.mxu0 0
        %799 = vmatprep.subr.bf16.mxu0 0
        %800 = vmatpush1.bf16.msra.mxu0 0
        %801 = vmatprep.subr.bf16.mxu0 0
        %802 = vmatpush1.bf16.msra.mxu0 0
        %803 = vmatprep.subr.bf16.mxu0 0
        %804 = vmatpush1.bf16.msra.mxu0 0
        %805 = vmatprep.subr.bf16.mxu0 0
        %806 = vmatpush1.bf16.msra.mxu0 0
        %807 = vmatprep.subr.bf16.mxu0 0
        %808 = vmatpush1.bf16.msra.mxu0 0
        %809 = vmatprep.subr.bf16.mxu0 0
        %810 = vmatpush1.bf16.msra.mxu0 0
        %811 = vmatprep.subr.bf16.mxu0 0
        %812 = vmatpush1.bf16.msra.mxu0 0
        %813 = vmatprep.subr.bf16.mxu0 0
        %814 = vmatpush1.bf16.msra.mxu0 0
        %815 = vmatprep.subr.bf16.mxu0 0
        %816 = vmatpush1.bf16.msra.mxu0 0
        %817 = vmatprep.subr.bf16.mxu0 0
        %818 = vmatpush1.bf16.msra.mxu0 0
        %819 = vmatprep.mubr.bf16.mxu0 0
        %820 = vmatmul.mubr.bf16.gmra.mrb[0].mxu0 %v785
        %v821 = vpop.f32.mrb[0].mxu0
        %v822 = vadd.f32 %v751, %v821
        %v823 = vpop.f32.mrb[0].mxu0
        %v824 = vpop.f32.mrb[0].mxu0
        %v825 = vadd.f32 %v754, %v824
        %v826 = vpop.f32.mrb[0].mxu0
        %827 = vdwg.mxu0
        %v828 = vld [vmem:[%s562] sm:$0x3]
        %v829 = vld [vmem:[%s562 + $0x4] sm:$0x3]
        %v830 = vld [vmem:[%s562 + $0x8] sm:$0x3]
        %v831 = vld [vmem:[%s562 + $0xc] sm:$0x3]
        %s832 = scalar_lea.vmem %s3, 16
        %v833 = vld [vmem:[%s832] sm:$0xf]
        %v834 = vld [vmem:[%s832 + $0x4] sm:$0xf]
        %v839 = vcombine.low %v828, %v829
        %v840 = vcombine.low %v830, %v831
        %v842 = vunpack.c.l.s4 1983009808
        %v843 = vunpack.c.0.s8 %v842
        %v844 = vlaneseq
        %v845 = vshrl.u32 %v844, 7
        %v846 = vsub.s32 %v843, %v845
        %v847 = vrot.slane %v839, %v846
        %v849 = vunpack.c.l.s4 1983009808
        %v850 = vunpack.c.0.s8 %v849
        %v851 = vlaneseq
        %v852 = vshrl.u32 %v851, 7
        %v853 = vsub.s32 %v850, %v852
        %v854 = vrot.slane %v840, %v853
        %v855 = vcombine.low %v847, %v854
        %v858 = vunpack.c.l.b16 %v833
        %v859 = vunpack.c.l.b16 %v834
        %v860 = vpack.c.b16 %v859, %v858
        %v863 = vsel %vm712, %v855, 0
        %865 = vmatprep.subr.bf16.mxu0 0
        %866 = vmatpush1.bf16.msra.mxu0 %v860
        %867 = vmatprep.subr.bf16.mxu0 0
        %868 = vmatpush1.bf16.msra.mxu0 0
        %869 = vmatprep.subr.bf16.mxu0 0
        %870 = vmatpush1.bf16.msra.mxu0 0
        %871 = vmatprep.subr.bf16.mxu0 0
        %872 = vmatpush1.bf16.msra.mxu0 0
        %873 = vmatprep.subr.bf16.mxu0 0
        %874 = vmatpush1.bf16.msra.mxu0 0
        %875 = vmatprep.subr.bf16.mxu0 0
        %876 = vmatpush1.bf16.msra.mxu0 0
        %877 = vmatprep.subr.bf16.mxu0 0
        %878 = vmatpush1.bf16.msra.mxu0 0
        %879 = vmatprep.subr.bf16.mxu0 0
        %880 = vmatpush1.bf16.msra.mxu0 0
        %881 = vmatprep.subr.bf16.mxu0 0
        %882 = vmatpush1.bf16.msra.mxu0 0
        %883 = vmatprep.subr.bf16.mxu0 0
        %884 = vmatpush1.bf16.msra.mxu0 0
        %885 = vmatprep.subr.bf16.mxu0 0
        %886 = vmatpush1.bf16.msra.mxu0 0
        %887 = vmatprep.subr.bf16.mxu0 0
        %888 = vmatpush1.bf16.msra.mxu0 0
        %889 = vmatprep.subr.bf16.mxu0 0
        %890 = vmatpush1.bf16.msra.mxu0 0
        %891 = vmatprep.subr.bf16.mxu0 0
        %892 = vmatpush1.bf16.msra.mxu0 0
        %893 = vmatprep.subr.bf16.mxu0 0
        %894 = vmatpush1.bf16.msra.mxu0 0
        %895 = vmatprep.subr.bf16.mxu0 0
        %896 = vmatpush1.bf16.msra.mxu0 0
        %897 = vmatprep.mubr.bf16.mxu0 0
        %898 = vmatmul.mubr.bf16.gmra.mrb[0].mxu0 %v863
        %v899 = vpop.f32.mrb[0].mxu0
        %v900 = vadd.f32 0.0, %v899
        %v901 = vpop.f32.mrb[0].mxu0
        %v902 = vpop.f32.mrb[0].mxu0
        %v903 = vadd.f32 0.0, %v902
        %v904 = vpop.f32.mrb[0].mxu0
        %905 = vdwg.mxu0
        %v906 = vadd.f32 %v822, %v900
        %v907 = vadd.f32 %v825, %v903
        %v908 = vld [vmem:[%s562] sm:$0x7]
        %v909 = vld [vmem:[%s562 + $0x4] sm:$0x7]
        %v910 = vld [vmem:[%s562 + $0x8] sm:$0x7]
        %v911 = vld [vmem:[%s562 + $0xc] sm:$0x7]
        %v917 = vunpack.c.l.s4 1983009808
        %v918 = vunpack.c.0.s8 %v917
        %v919 = vlaneseq
        %v920 = vshrl.u32 %v919, 7
        %v921 = vsub.s32 %v918, %v920
        %v922 = vrot.slane %v908, %v921
        %v923 = vcombine.high %v922, %v922
        %v925 = vunpack.c.l.s4 1983009808
        %v926 = vunpack.c.0.s8 %v925
        %v927 = vlaneseq
        %v928 = vshrl.u32 %v927, 7
        %v929 = vsub.s32 %v926, %v928
        %v930 = vrot.slane %v909, %v929
        %v931 = vcombine.high %v930, %v930
        %v933 = vunpack.c.l.s4 1983009808
        %v934 = vunpack.c.0.s8 %v933
        %v935 = vlaneseq
        %v936 = vshrl.u32 %v935, 7
        %v937 = vsub.s32 %v934, %v936
        %v938 = vrot.slane %v910, %v937
        %v939 = vcombine.high %v938, %v938
        %v941 = vunpack.c.l.s4 1983009808
        %v942 = vunpack.c.0.s8 %v941
        %v943 = vlaneseq
        %v944 = vshrl.u32 %v943, 7
        %v945 = vsub.s32 %v942, %v944
        %v946 = vrot.slane %v911, %v945
        %v947 = vcombine.high %v946, %v946
        %v949 = vshrl.u32 %v922, 16
        %v951 = vrot.slane %v949, 6
        %v952 = vshll.u32 %v922, 16
        %v954 = vrot.slane %v952, 7
        %v955 = vor.u32 %v951, %v954
        %v956 = vrot.slane %v955, 2
        %v958 = vshll.u32 %v923, 16
        %v960 = vrot.slane %v958, 7
        %v961 = vsel %vm629, %v956, %v960
        %v963 = vshrl.u32 %v930, 16
        %v965 = vrot.slane %v963, 6
        %v966 = vshll.u32 %v930, 16
        %v968 = vrot.slane %v966, 7
        %v969 = vor.u32 %v965, %v968
        %v970 = vrot.slane %v969, 2
        %v972 = vshll.u32 %v931, 16
        %v974 = vrot.slane %v972, 7
        %v975 = vsel %vm629, %v970, %v974
        %v977 = vshrl.u32 %v938, 16
        %v979 = vrot.slane %v977, 6
        %v980 = vshll.u32 %v938, 16
        %v982 = vrot.slane %v980, 7
        %v983 = vor.u32 %v979, %v982
        %v984 = vrot.slane %v983, 2
        %v986 = vshll.u32 %v939, 16
        %v988 = vrot.slane %v986, 7
        %v989 = vsel %vm629, %v984, %v988
        %v991 = vshrl.u32 %v946, 16
        %v993 = vrot.slane %v991, 6
        %v994 = vshll.u32 %v946, 16
        %v996 = vrot.slane %v994, 7
        %v997 = vor.u32 %v993, %v996
        %v998 = vrot.slane %v997, 2
        %v1000 = vshll.u32 %v947, 16
        %v1002 = vrot.slane %v1000, 7
        %v1003 = vsel %vm629, %v998, %v1002
        %s1004 = scalar_lea.vmem %s3, 24
        %v1005 = vld [vmem:[%s1004] sm:$0xf]
        %v1006 = vld [vmem:[%s1004 + $0x4] sm:$0xf]
        %v1007 = vcombine.low %v961, %v975
        %v1008 = vcombine.low %v989, %v1003
        %v1010 = vunpack.c.l.s4 1983009808
        %v1011 = vunpack.c.0.s8 %v1010
        %v1012 = vlaneseq
        %v1013 = vshrl.u32 %v1012, 7
        %v1014 = vsub.s32 %v1011, %v1013
        %v1015 = vrot.slane %v1007, %v1014
        %v1017 = vunpack.c.l.s4 1983009808
        %v1018 = vunpack.c.0.s8 %v1017
        %v1019 = vlaneseq
        %v1020 = vshrl.u32 %v1019, 7
        %v1021 = vsub.s32 %v1018, %v1020
        %v1022 = vrot.slane %v1008, %v1021
        %v1023 = vcombine.low %v1015, %v1022
        %v1026 = vunpack.c.l.b16 %v1005
        %v1027 = vunpack.c.l.b16 %v1006
        %v1028 = vpack.c.b16 %v1027, %v1026
        %v1031 = vsel %vm712, %v1023, 0
        %1033 = vmatprep.subr.bf16.mxu0 0
        %1034 = vmatpush1.bf16.msra.mxu0 %v1028
        %1035 = vmatprep.subr.bf16.mxu0 0
        %1036 = vmatpush1.bf16.msra.mxu0 0
        %1037 = vmatprep.subr.bf16.mxu0 0
        %1038 = vmatpush1.bf16.msra.mxu0 0
        %1039 = vmatprep.subr.bf16.mxu0 0
        %1040 = vmatpush1.bf16.msra.mxu0 0
        %1041 = vmatprep.subr.bf16.mxu0 0
        %1042 = vmatpush1.bf16.msra.mxu0 0
        %1043 = vmatprep.subr.bf16.mxu0 0
        %1044 = vmatpush1.bf16.msra.mxu0 0
        %1045 = vmatprep.subr.bf16.mxu0 0
        %1046 = vmatpush1.bf16.msra.mxu0 0
        %1047 = vmatprep.subr.bf16.mxu0 0
        %1048 = vmatpush1.bf16.msra.mxu0 0
        %1049 = vmatprep.subr.bf16.mxu0 0
        %1050 = vmatpush1.bf16.msra.mxu0 0
        %1051 = vmatprep.subr.bf16.mxu0 0
        %1052 = vmatpush1.bf16.msra.mxu0 0
        %1053 = vmatprep.subr.bf16.mxu0 0
        %1054 = vmatpush1.bf16.msra.mxu0 0
        %1055 = vmatprep.subr.bf16.mxu0 0
        %1056 = vmatpush1.bf16.msra.mxu0 0
        %1057 = vmatprep.subr.bf16.mxu0 0
        %1058 = vmatpush1.bf16.msra.mxu0 0
        %1059 = vmatprep.subr.bf16.mxu0 0
        %1060 = vmatpush1.bf16.msra.mxu0 0
        %1061 = vmatprep.subr.bf16.mxu0 0
        %1062 = vmatpush1.bf16.msra.mxu0 0
        %1063 = vmatprep.subr.bf16.mxu0 0
        %1064 = vmatpush1.bf16.msra.mxu0 0
        %1065 = vmatprep.mubr.bf16.mxu0 0
        %1066 = vmatmul.mubr.bf16.gmra.mrb[0].mxu0 %v1031
        %v1067 = vpop.f32.mrb[0].mxu0
        %v1068 = vadd.f32 0.0, %v1067
        %v1069 = vpop.f32.mrb[0].mxu0
        %v1070 = vpop.f32.mrb[0].mxu0
        %v1071 = vadd.f32 0.0, %v1070
        %v1072 = vpop.f32.mrb[0].mxu0
        %1073 = vdwg.mxu0
        %v1074 = vadd.f32 %v906, %v1068
        %v1075 = vadd.f32 %v907, %v1071
        %v1076 = vld [vmem:[%s4] sm:$0x1]
        %v1078 = vlaneseq
        %v1079 = vshrl.u32 %v1078, 7
        %v1080 = vsub.s32 0, %v1079
        %v1081 = vrot.slane %v1076, %v1080
        %v1083 = vadd.f32 %v1074, %v1081
        %v1084 = vadd.f32 %v1075, %v1081
        %v1085 = vmax.f32 %v1083, 0.0
        %v1086 = vmax.f32 %v1084, 0.0
        %v1087 = vpack.c.bf16 %v1086, %v1085
        %v1088 = vld [vmem:[%s5] sm:$0xf]
        %v1089 = vld [vmem:[%s5 + $0x4] sm:$0xf]
        %v1090 = vld [vmem:[%s5 + $0x8] sm:$0xf]
        %v1091 = vld [vmem:[%s5 + $0xc] sm:$0xf]
        %v1092 = vld [vmem:[%s5 + $0x10] sm:$0xf]
        %v1093 = vld [vmem:[%s5 + $0x14] sm:$0xf]
        %v1094 = vld [vmem:[%s5 + $0x18] sm:$0xf]
        %v1095 = vld [vmem:[%s5 + $0x1c] sm:$0xf]
        %v1096 = vld [vmem:[%s5 + $0x20] sm:$0xf]
        %v1097 = vld [vmem:[%s5 + $0x24] sm:$0xf]
        %v1098 = vld [vmem:[%s5 + $0x28] sm:$0xf]
        %v1099 = vld [vmem:[%s5 + $0x2c] sm:$0xf]
        %v1100 = vld [vmem:[%s5 + $0x30] sm:$0xf]
        %v1101 = vld [vmem:[%s5 + $0x34] sm:$0xf]
        %v1102 = vld [vmem:[%s5 + $0x38] sm:$0xf]
        %v1103 = vld [vmem:[%s5 + $0x3c] sm:$0xf]
        %v1104 = vld [vmem:[%s6] sm:$0x1]
        %v1106 = vlaneseq
        %v1107 = vshrl.u32 %v1106, 7
        %v1108 = vsub.s32 0, %v1107
        %v1109 = vrot.slane %v1104, %v1108
        %v1127 = vunpack.c.l.b16 %v1088
        %v1128 = vunpack.c.l.b16 %v1089
        %v1129 = vunpack.c.l.b16 %v1090
        %v1130 = vunpack.c.l.b16 %v1091
        %v1131 = vunpack.c.l.b16 %v1092
        %v1132 = vunpack.c.l.b16 %v1093
        %v1133 = vunpack.c.l.b16 %v1094
        %v1134 = vunpack.c.l.b16 %v1095
        %v1135 = vunpack.c.l.b16 %v1096
        %v1136 = vunpack.c.l.b16 %v1097
        %v1137 = vunpack.c.l.b16 %v1098
        %v1138 = vunpack.c.l.b16 %v1099
        %v1139 = vunpack.c.l.b16 %v1100
        %v1140 = vunpack.c.l.b16 %v1101
        %v1141 = vunpack.c.l.b16 %v1102
        %v1142 = vunpack.c.l.b16 %v1103
        %v1143 = vpack.c.b16 %v1128, %v1127
        %v1144 = vpack.c.b16 %v1130, %v1129
        %v1145 = vpack.c.b16 %v1132, %v1131
        %v1146 = vpack.c.b16 %v1134, %v1133
        %v1147 = vpack.c.b16 %v1136, %v1135
        %v1148 = vpack.c.b16 %v1138, %v1137
        %v1149 = vpack.c.b16 %v1140, %v1139
        %v1150 = vpack.c.b16 %v1142, %v1141
        %1159 = vmatprep.subr.bf16.mxu0 0
        %1160 = vmatpush1.bf16.msra.mxu0 %v1143
        %1161 = vmatprep.subr.bf16.mxu0 0
        %1162 = vmatpush1.bf16.msra.mxu0 %v1144
        %1163 = vmatprep.subr.bf16.mxu0 0
        %1164 = vmatpush1.bf16.msra.mxu0 %v1145
        %1165 = vmatprep.subr.bf16.mxu0 0
        %1166 = vmatpush1.bf16.msra.mxu0 %v1146
        %1167 = vmatprep.subr.bf16.mxu0 0
        %1168 = vmatpush1.bf16.msra.mxu0 %v1147
        %1169 = vmatprep.subr.bf16.mxu0 0
        %1170 = vmatpush1.bf16.msra.mxu0 %v1148
        %1171 = vmatprep.subr.bf16.mxu0 0
        %1172 = vmatpush1.bf16.msra.mxu0 %v1149
        %1173 = vmatprep.subr.bf16.mxu0 0
        %1174 = vmatpush1.bf16.msra.mxu0 %v1150
        %1175 = vmatprep.subr.bf16.mxu0 0
        %1176 = vmatpush1.bf16.msra.mxu0 0
        %1177 = vmatprep.subr.bf16.mxu0 0
        %1178 = vmatpush1.bf16.msra.mxu0 0
        %1179 = vmatprep.subr.bf16.mxu0 0
        %1180 = vmatpush1.bf16.msra.mxu0 0
        %1181 = vmatprep.subr.bf16.mxu0 0
        %1182 = vmatpush1.bf16.msra.mxu0 0
        %1183 = vmatprep.subr.bf16.mxu0 0
        %1184 = vmatpush1.bf16.msra.mxu0 0
        %1185 = vmatprep.subr.bf16.mxu0 0
        %1186 = vmatpush1.bf16.msra.mxu0 0
        %1187 = vmatprep.subr.bf16.mxu0 0
        %1188 = vmatpush1.bf16.msra.mxu0 0
        %1189 = vmatprep.subr.bf16.mxu0 0
        %1190 = vmatpush1.bf16.msra.mxu0 0
        %1191 = vmatprep.mubr.bf16.mxu0 0
        %1192 = vmatmul.mubr.bf16.gmra.mrb[0].mxu0 %v1087
        %v1193 = vpop.f32.mrb[0].mxu0
        %v1194 = vadd.f32 %v1109, %v1193
        %v1195 = vpop.f32.mrb[0].mxu0
        %v1196 = vpop.f32.mrb[0].mxu0
        %v1197 = vadd.f32 %v1109, %v1196
        %v1198 = vpop.f32.mrb[0].mxu0
        %1199 = vdwg.mxu0
        %v1202 = vcombine.high %v1194, %v1194
        %v1203 = vcombine.high %v1197, %v1197
        %v1206 = vpack.c.bf16 %v1194, %v1194
        %v1207 = vpack.c.bf16 %v1202, %v1202
        %v1208 = vpack.c.bf16 %v1197, %v1197
        %v1209 = vpack.c.bf16 %v1203, %v1203
        %vm1210 = vcmask 254976
        %1211 = vst.msk [vmem:[%s271] sm:$0x3] %vm1210, %v1206
        %1212 = vst.msk [vmem:[%s271 + $0x2] sm:$0x3] %vm1210, %v1207
        %1213 = vst.msk [vmem:[%s271 + $0x4] sm:$0x3] %vm1210, %v1208
        %1214 = vst.msk [vmem:[%s271 + $0x6] sm:$0x3] %vm1210, %v1209
        %s1215 = sand.u32 %s181, 1
        %s1216 = scalar_lea.sflag [#allocation4], %s1215
        %s1217 = sand.u32 %s181, 1
        %s1218 = smul.addr %s1217, 8
        %s1219 = scalar_lea.vmem [#allocation3], %s1218
        // Predicated region
        $region49: #{convstem_forward.1} parent=47 // pred_check
          %p1220 = pneg %p191
        $region50: #{convstem_forward.1} parent=47 // pred_check_branch
          %1222 = sbr.rel (%p1220) target = $region52
        $region51: #{convstem_forward.1} parent=47 // pred_region
          %s1224 = ssub.s32 128, 128
          %1225 = vsyncadd %s1216, %s1224
          %s1226 = smul.addr %s21, 4
          %s1227 = smul.addr %s1226, 32
          %s1228 = scalar_lea.hbm %s7, %s1227
          %s1229 = sshll.u32 %s1219, 4
          %s1230 = int_to_ptr.vmem [resolvable:$true] %s1229
          %1235 = dma.vmem_to_hbm [thread:$0]  %s1230, 128, %s1228, %s1216, 32, 32, 2
        $region52: #{convstem_forward.1} parent=47 // pred_fallthru
          _
      $region48: #{convstem_forward.1} parent=5 // pred_fallthru
        _
      %p1236 = scmp.le.s32.totalorder 2, %s16
      // Predicated region
      $region53: #{convstem_forward.1} parent=5 // pred_check
        %p1237 = pneg %p1236
      $region54: #{convstem_forward.1} parent=5 // pred_check_branch
        %1239 = sbr.rel (%p1237) target = $region56
      $region55: #{convstem_forward.1} parent=5 // pred_region
        %s1240 = ssub.s32 %s16, 2
        // Predicated region
        $region57: #{convstem_forward.1} parent=55 // pred_check
          %p1241 = pneg %p197
        $region58: #{convstem_forward.1} parent=55 // pred_check_branch
          %1243 = sbr.rel (%p1241) target = $region60
        $region59: #{convstem_forward.1} parent=55 // pred_region
          %s1244 = sand.u32 %s182, 1
          %s1245 = scalar_lea.sflag [#allocation4], %s1244
          %s1246 = sand.u32 %s182, 1
          %s1247 = smul.addr %s1246, 8
          %s1248 = scalar_lea.vmem [#allocation3], %s1247
          %1249 = dma.done %s1245, 128
        $region60: #{convstem_forward.1} parent=55 // pred_fallthru
          _
      $region56: #{convstem_forward.1} parent=5 // pred_fallthru
        _
    $region6: #{convstem_forward.1} parent=1 // loop_footer
      %s20 = sadd.s32 1, %s16
    $region7: #{convstem_forward.1} parent=1 // loop_footer_branch
      %15 = sbr.rel target = $region3
    $region8: #{convstem_forward.1} parent=1 // loop_exit
      _
    %1250 = vsyncpa [#allocation4], 1
    %s1251 = scalar_lea.sflag [#allocation4], 1
    %1252 = vsyncpa %s1251, 1

</llo_original>
